<compile_context>
chip_gen: v7x
topology: tpu7x:2x2x1
jax: 0.10.0
libtpu: 0.0.40
codegen_flags: <defaults>
</compile_context>

<pallas_src>
from typing import NamedTuple, Optional

import jax
import jax.numpy as jnp
from jax import lax
from jax.experimental import pallas as pl
from jax.experimental.pallas import tpu as pltpu

# ----------------------------- sizes (small, synthetic) -----------------------------
B = 8          # batch (full f32 sublane height)
HID = 32       # state_emb / autoregressive embedding width
SCL = 32       # scalar_emb width
ENT = 32       # per-move / per-switch entity embedding width
MLP = 32       # hidden width of each head's 2-layer MLP
ATYPES = 4     # action types; convention: 0 = move, 1 = switch
NMOVES = 4
NSWITCH = 6
NFLAGS = 4

HEADW = 8      # uniform padded logits / mask width for every head
NPAD = 8       # padded entity count for moves / switches
XMW = 128      # lane width of the packed data+mask input slab and f32 output slab
MOFF = HID + SCL   # lane offset where the packed masks start (64)
NEG = -1e30

# ----------------------------- packed parameter layout -----------------------------
# Weight slab: row-stacked, 32 lanes wide, every block sublane(8)-aligned.
_W_LAYOUT = (
    ("at_w1", 64, 32),          # concat(state, scalar) -> MLP hidden
    ("at_w2", 32, HEADW),       # MLP hidden -> action-type logits (cols 4:8 zero)
    ("at_embed", HEADW, HID),   # action-type embedding table (rows 4:8 zero)
    ("mv_wq1", 32, 32), ("mv_wq2", 32, 32), ("mv_wp", 32, 32),
    ("sw_wq1", 32, 32), ("sw_wq2", 32, 32), ("sw_wp", 32, 32),
    ("fl_w1", 32, 32), ("fl_w2", 32, HEADW), ("fl_embed", HEADW, HID),
    ("mm_wq1", 32, 32), ("mm_wq2", 32, 32),
)
_W_OFF = {}
_row = 0
for _name, _rows, _cols in _W_LAYOUT:
    _W_OFF[_name] = (_row, _rows, _cols)
    _row += _rows
W_TOTAL_ROWS = _row          # 432 (multiple of 8)

_B_LAYOUT = ("at_b1", "at_b2", "mv_bq1", "mv_bq2", "mv_bp",
             "sw_bq1", "sw_bq2", "sw_bp", "fl_b1", "fl_b2", "mm_bq1", "mm_bq2")
_B_IDX = {n: i for i, n in enumerate(_B_LAYOUT)}
_B_COLS = {"at_b2": HEADW, "fl_b2": HEADW}
B_SLAB_ROWS = 16             # 12 biases, padded to 16 rows

# Output f32 slab lane offsets (each head gets an 8-lane chunk).
_L_LOGITS = {"at": 0, "mv": 8, "sw": 16, "fl": 24, "mm": 32}
_L_POLICY = {k: 64 + v for k, v in _L_LOGITS.items()}
_L_INDEX = {"at": 0, "mv": 1, "sw": 2, "fl": 3, "mm": 4}


# ----------------------------- in-kernel helpers -----------------------------
def _masked_softmax_argmax(raw_logits, mask):
    """Returns (masked logits, softmax policy, greedy index (B,1) int32)."""
    masked = jnp.where(mask > 0.0, raw_logits, NEG)
    m = jnp.max(masked, axis=-1, keepdims=True)
    e = jnp.exp(masked - m)
    denom = jnp.sum(e, axis=-1, keepdims=True)
    policy = e * pl.reciprocal(denom, approx=True)          # divide on the EUP slot
    n = masked.shape[-1]
    iota = lax.broadcasted_iota(jnp.int32, masked.shape, 1)
    idx = jnp.min(jnp.where(masked == m, iota, n), axis=-1, keepdims=True)
    return masked, policy, idx


def _one_hot(idx, n):
    iota = lax.broadcasted_iota(jnp.int32, (idx.shape[0], n), 1)
    return (iota == idx).astype(jnp.float32)


# ----------------------------- the fused kernel -----------------------------
def policy_heads_kernel(xm_ref, ents_ref, w_ref, b_ref, fp_ref, idx_ref):
    xm = xm_ref[...]              # (B, 128)  [state | scalar | 5 masks (8 lanes each) | pad]
    ents = ents_ref[...]          # (B, 16, ENT)  [moves padded to 8 | switches padded to 8]
    bias_all = b_ref[...]         # (16, 32)
    bsz = xm.shape[0]

    def W(name):
        off, r, c = _W_OFF[name]
        return w_ref[off:off + r, 0:c]

    def Bv(name):
        i = _B_IDX[name]
        c = _B_COLS.get(name, 32)
        return bias_all[i:i + 1, 0:c]

    def mlp2(x, w1n, b1n, w2n, b2n):
        h = jnp.maximum(
            jnp.dot(x, W(w1n), preferred_element_type=jnp.float32) + Bv(b1n), 0.0)
        return jnp.dot(h, W(w2n), preferred_element_type=jnp.float32) + Bv(b2n)

    state_emb = xm[:, 0:HID]
    x_cat = xm[:, 0:HID + SCL]
    at_mask = xm[:, MOFF + 0 * HEADW: MOFF + 1 * HEADW]
    mv_mask = xm[:, MOFF + 1 * HEADW: MOFF + 2 * HEADW]
    sw_mask = xm[:, MOFF + 2 * HEADW: MOFF + 3 * HEADW]
    fl_mask = xm[:, MOFF + 3 * HEADW: MOFF + 4 * HEADW]
    mm_mask = xm[:, MOFF + 4 * HEADW: MOFF + 5 * HEADW]

    moves = ents[:, 0:NPAD, :]          # (B, 8, ENT)  rows >= NMOVES are zero
    switches = ents[:, NPAD:2 * NPAD, :]  # (B, 8, ENT)  rows >= NSWITCH are zero

    # --------------- ActionTypeHead ---------------
    at_raw = mlp2(x_cat, "at_w1", "at_b1", "at_w2", "at_b2")            # (B, 8)
    at_logits, at_policy, at_idx = _masked_softmax_argmax(at_raw, at_mask)
    ar = state_emb + jnp.dot(_one_hot(at_idx, HEADW), W("at_embed"),
                             preferred_element_type=jnp.float32)

    # --------------- MoveHead (pointer over padded move embeddings) ---------------
    q = mlp2(ar, "mv_wq1", "mv_bq1", "mv_wq2", "mv_bq2")                # (B, ENT)
    mv_raw = jnp.sum(q[:, None, :] * moves, axis=-1)                    # (B, 8)
    mv_logits, mv_policy, mv_idx = _masked_softmax_argmax(mv_raw, mv_mask)
    mv_sel = jnp.sum(_one_hot(mv_idx, NPAD)[:, :, None] * moves, axis=1)
    mv_gate = (at_idx == 0).astype(jnp.float32)     # update ar only when action == move
    ar = ar + mv_gate * (
        jnp.dot(mv_sel, W("mv_wp"), preferred_element_type=jnp.float32) + Bv("mv_bp"))

    # --------------- SwitchHead (pointer over padded switch embeddings) ---------------
    q = mlp2(ar, "sw_wq1", "sw_bq1", "sw_wq2", "sw_bq2")
    sw_raw = jnp.sum(q[:, None, :] * switches, axis=-1)
    sw_logits, sw_policy, sw_idx = _masked_softmax_argmax(sw_raw, sw_mask)
    sw_sel = jnp.sum(_one_hot(sw_idx, NPAD)[:, :, None] * switches, axis=1)
    sw_gate = (at_idx == 1).astype(jnp.float32)     # update ar only when action == switch
    ar = ar + sw_gate * (
        jnp.dot(sw_sel, W("sw_wp"), preferred_element_type=jnp.float32) + Bv("sw_bp"))

    # --------------- FlagsHead (gen >= 6) ---------------
    fl_raw = mlp2(ar, "fl_w1", "fl_b1", "fl_w2", "fl_b2")               # (B, 8)
    fl_logits, fl_policy, fl_idx = _masked_softmax_argmax(fl_raw, fl_mask)
    ar = ar + jnp.dot(_one_hot(fl_idx, HEADW), W("fl_embed"),
                      preferred_element_type=jnp.float32)

    # --------------- MaxMoveHead (gen == 8) ---------------
    q = mlp2(ar, "mm_wq1", "mm_bq1", "mm_wq2", "mm_bq2")
    mm_raw = jnp.sum(q[:, None, :] * moves, axis=-1)
    mm_logits, mm_policy, mm_idx = _masked_softmax_argmax(mm_raw, mm_mask)

    # --------------- pack outputs into two lane-dense slabs ---------------
    fp_ref[...] = jnp.zeros_like(fp_ref)
    fp_ref[:, _L_LOGITS["at"]:_L_LOGITS["at"] + HEADW] = at_logits
    fp_ref[:, _L_LOGITS["mv"]:_L_LOGITS["mv"] + HEADW] = mv_logits
    fp_ref[:, _L_LOGITS["sw"]:_L_LOGITS["sw"] + HEADW] = sw_logits
    fp_ref[:, _L_LOGITS["fl"]:_L_LOGITS["fl"] + HEADW] = fl_logits
    fp_ref[:, _L_LOGITS["mm"]:_L_LOGITS["mm"] + HEADW] = mm_logits
    fp_ref[:, _L_POLICY["at"]:_L_POLICY["at"] + HEADW] = at_policy
    fp_ref[:, _L_POLICY["mv"]:_L_POLICY["mv"] + HEADW] = mv_policy
    fp_ref[:, _L_POLICY["sw"]:_L_POLICY["sw"] + HEADW] = sw_policy
    fp_ref[:, _L_POLICY["fl"]:_L_POLICY["fl"] + HEADW] = fl_policy
    fp_ref[:, _L_POLICY["mm"]:_L_POLICY["mm"] + HEADW] = mm_policy

    idx_ref[...] = jnp.zeros_like(idx_ref)
    idx_ref[:, _L_INDEX["at"]:_L_INDEX["at"] + 1] = at_idx
    idx_ref[:, _L_INDEX["mv"]:_L_INDEX["mv"] + 1] = mv_idx
    idx_ref[:, _L_INDEX["sw"]:_L_INDEX["sw"] + 1] = sw_idx
    idx_ref[:, _L_INDEX["fl"]:_L_INDEX["fl"] + 1] = fl_idx
    idx_ref[:, _L_INDEX["mm"]:_L_INDEX["mm"] + 1] = mm_idx


# ----------------------------- output containers -----------------------------
class Indices(NamedTuple):
    action_type_index: jax.Array
    move_index: jax.Array
    max_move_index: Optional[jax.Array]
    switch_index: jax.Array
    flag_index: Optional[jax.Array]
    target_index: Optional[jax.Array]


class Logits(NamedTuple):
    action_type_logits: jax.Array
    move_logits: jax.Array
    max_move_logits: Optional[jax.Array]
    switch_logits: jax.Array
    flag_logits: Optional[jax.Array]
    target_logits: Optional[jax.Array]


class Policy(NamedTuple):
    action_type_policy: jax.Array
    move_policy: jax.Array
    max_move_policy: Optional[jax.Array]
    switch_policy: jax.Array
    flag_policy: Optional[jax.Array]
    target_policy: Optional[jax.Array]


# ----------------------------- host-side packing -----------------------------
def pack_params(params):
    """Pack the per-layer parameter dict into two contiguous f32 slabs (done once)."""
    wslab = jnp.zeros((W_TOTAL_ROWS, 32), jnp.float32)
    for name, _rows, _cols in _W_LAYOUT:
        off = _W_OFF[name][0]
        p = params[name].astype(jnp.float32)
        wslab = wslab.at[off:off + p.shape[0], 0:p.shape[1]].set(p)
    bslab = jnp.zeros((B_SLAB_ROWS, 32), jnp.float32)
    for name in _B_LAYOUT:
        i = _B_IDX[name]
        p = params[name].astype(jnp.float32)
        bslab = bslab.at[i:i + 1, 0:p.shape[1]].set(p)
    return {"wslab": wslab, "bslab": bslab}


def _cost_estimate(bsz):
    macs = (HID + SCL) * MLP + MLP * HEADW + HEADW * HID                       # action type
    macs += 2 * (HID * MLP + MLP * ENT + NPAD * ENT + NPAD * ENT + ENT * HID)  # move + switch
    macs += HID * MLP + MLP * HEADW + HEADW * HID                              # flags
    macs += HID * MLP + MLP * ENT + NPAD * ENT                                 # max move
    flops = 2 * macs * bsz
    transcendentals = 5 * HEADW * bsz
    bytes_accessed = 4 * (bsz * XMW + bsz * 2 * NPAD * ENT
                          + W_TOTAL_ROWS * 32 + B_SLAB_ROWS * 32
                          + bsz * XMW + bsz * HEADW)
    return pl.CostEstimate(flops=flops, transcendentals=transcendentals,
                           bytes_accessed=bytes_accessed)


# ----------------------------- wrapper -----------------------------
@jax.jit
def policy_heads_forward(packed_params, state_emb, scalar_emb, moves, switches,
                         action_type_mask, move_mask, switch_mask, flag_mask,
                         max_move_mask):
    bsz = state_emb.shape[0]
    f32 = jnp.float32

    def pad_mask(m):
        m = m.astype(f32)
        return jnp.pad(m, ((0, 0), (0, HEADW - m.shape[-1])))

    def pad_ents(e):
        return jnp.pad(e.astype(f32), ((0, 0), (0, NPAD - e.shape[1]), (0, 0)))

    # one (B, 128) data+mask slab, one (B, 16, ENT) entity slab -> 4 input DMAs total
    xm = jnp.concatenate(
        [state_emb.astype(f32), scalar_emb.astype(f32),
         pad_mask(action_type_mask), pad_mask(move_mask), pad_mask(switch_mask),
         pad_mask(flag_mask), pad_mask(max_move_mask),
         jnp.zeros((bsz, XMW - (HID + SCL + 5 * HEADW)), f32)], axis=-1)
    ents = jnp.concatenate([pad_ents(moves), pad_ents(switches)], axis=1)

    fp, idx = pl.pallas_call(
        policy_heads_kernel,
        out_shape=(jax.ShapeDtypeStruct((bsz, XMW), f32),
                   jax.ShapeDtypeStruct((bsz, HEADW), jnp.int32)),
        in_specs=[pl.BlockSpec(memory_space=pltpu.MemorySpace.VMEM)] * 4,
        out_specs=(pl.BlockSpec(memory_space=pltpu.MemorySpace.VMEM),
                   pl.BlockSpec(memory_space=pltpu.MemorySpace.VMEM)),
        cost_estimate=_cost_estimate(bsz),
    )(xm, ents, packed_params["wslab"], packed_params["bslab"])

    def lg(head, n):
        return fp[:, _L_LOGITS[head]:_L_LOGITS[head] + n]

    def po(head, n):
        return fp[:, _L_POLICY[head]:_L_POLICY[head] + n]

    def ix(head):
        return idx[:, _L_INDEX[head]:_L_INDEX[head] + 1]

    indices = Indices(
        action_type_index=ix("at"), move_index=ix("mv"), max_move_index=ix("mm"),
        switch_index=ix("sw"), flag_index=ix("fl"), target_index=None)
    logits = Logits(
        action_type_logits=lg("at", ATYPES), move_logits=lg("mv", NMOVES),
        max_move_logits=lg("mm", NMOVES), switch_logits=lg("sw", NSWITCH),
        flag_logits=lg("fl", NFLAGS), target_logits=None)
    policy = Policy(
        action_type_policy=po("at", ATYPES), move_policy=po("mv", NMOVES),
        max_move_policy=po("mm", NMOVES), switch_policy=po("sw", NSWITCH),
        flag_policy=po("fl", NFLAGS), target_policy=None)
    return indices, logits, policy


# ----------------------------- deterministic parameter init -----------------------------
def init_params(key):
    keys = iter(jax.random.split(key, 32))

    def w(fan_in, fan_out):
        return jax.random.normal(next(keys), (fan_in, fan_out), jnp.float32) / jnp.sqrt(
            float(fan_in))

    def b(n):
        return jnp.zeros((1, n), jnp.float32)

    return {
        "at_w1": w(HID + SCL, MLP), "at_b1": b(MLP),
        "at_w2": w(MLP, ATYPES), "at_b2": b(ATYPES), "at_embed": w(ATYPES, HID),
        "mv_wq1": w(HID, MLP), "mv_bq1": b(MLP), "mv_wq2": w(MLP, ENT), "mv_bq2": b(ENT),
        "mv_wp": w(ENT, HID), "mv_bp": b(HID),
        "sw_wq1": w(HID, MLP), "sw_bq1": b(MLP), "sw_wq2": w(MLP, ENT), "sw_bq2": b(ENT),
        "sw_wp": w(ENT, HID), "sw_bp": b(HID),
        "fl_w1": w(HID, MLP), "fl_b1": b(MLP), "fl_w2": w(MLP, NFLAGS), "fl_b2": b(NFLAGS),
        "fl_embed": w(NFLAGS, HID),
        "mm_wq1": w(HID, MLP), "mm_bq1": b(MLP), "mm_wq2": w(MLP, ENT), "mm_bq2": b(ENT),
    }


# ----------------------------- demo -----------------------------
if __name__ == "__main__":
    key = jax.random.PRNGKey(0)
    kp, kd = jax.random.split(key)
    params = init_params(kp)
    packed = pack_params(params)       # done once, outside the jitted forward

    ks = jax.random.split(kd, 9)
    state_emb = jax.random.normal(ks[0], (B, HID), jnp.float32)
    scalar_emb = jax.random.normal(ks[1], (B, SCL), jnp.float32)
    moves = jax.random.normal(ks[2], (B, NMOVES, ENT), jnp.float32)
    switches = jax.random.normal(ks[3], (B, NSWITCH, ENT), jnp.float32)

    def rand_mask(k, n):
        m = jax.random.bernoulli(k, 0.7, (B, n))
        return m.at[:, 0].set(True)    # guarantee at least one legal option per row

    action_type_mask = rand_mask(ks[4], ATYPES)
    move_mask = rand_mask(ks[5], NMOVES)
    switch_mask = rand_mask(ks[6], NSWITCH)
    flag_mask = rand_mask(ks[7], NFLAGS)
    max_move_mask = rand_mask(ks[8], NMOVES)

    indices, logits, policy = policy_heads_forward(
        packed, state_emb, scalar_emb, moves, switches,
        action_type_mask, move_mask, switch_mask, flag_mask, max_move_mask)

    jax.block_until_ready((indices, logits, policy))
    print("KERNEL_OK")
</pallas_src>

<mosaic_0001>
module attributes {stable_mosaic.version = 11 : i64} {
  func.func @policy_heads_kernel(%arg0: memref<8x128xf32, #tpu.memory_space<vmem>>, %arg1: memref<8x16x32xf32, #tpu.memory_space<vmem>>, %arg2: memref<432x32xf32, #tpu.memory_space<vmem>>, %arg3: memref<16x32xf32, #tpu.memory_space<vmem>>, %arg4: memref<8x128xf32, #tpu.memory_space<vmem>>, %arg5: memref<8x8xi32, #tpu.memory_space<vmem>>) attributes {dimension_semantics = [], scalar_prefetch = 0 : i64, scratch_operands = 0 : i64, tpu.core_type = #tpu.core_type<tc>} {
    %c0 = arith.constant 0 : index
    %c0_0 = arith.constant 0 : index
    %0 = vector.load %arg0[%c0, %c0_0] : memref<8x128xf32, #tpu.memory_space<vmem>>, vector<8x128xf32>
    %c0_1 = arith.constant 0 : index
    %c0_2 = arith.constant 0 : index
    %c0_3 = arith.constant 0 : index
    %1 = vector.load %arg1[%c0_1, %c0_2, %c0_3] : memref<8x16x32xf32, #tpu.memory_space<vmem>>, vector<8x16x32xf32>
    %c0_4 = arith.constant 0 : index
    %c0_5 = arith.constant 0 : index
    %2 = vector.load %arg3[%c0_4, %c0_5] : memref<16x32xf32, #tpu.memory_space<vmem>>, vector<16x32xf32>
    %3 = vector.extract_strided_slice %0 {offsets = [0, 0], sizes = [8, 32], strides = [1, 1]} : vector<8x128xf32> to vector<8x32xf32>
    %4 = vector.extract_strided_slice %0 {offsets = [0, 0], sizes = [8, 64], strides = [1, 1]} : vector<8x128xf32> to vector<8x64xf32>
    %5 = vector.extract_strided_slice %0 {offsets = [0, 64], sizes = [8, 8], strides = [1, 1]} : vector<8x128xf32> to vector<8x8xf32>
    %6 = vector.extract_strided_slice %0 {offsets = [0, 72], sizes = [8, 8], strides = [1, 1]} : vector<8x128xf32> to vector<8x8xf32>
    %7 = vector.extract_strided_slice %0 {offsets = [0, 80], sizes = [8, 8], strides = [1, 1]} : vector<8x128xf32> to vector<8x8xf32>
    %8 = vector.extract_strided_slice %0 {offsets = [0, 88], sizes = [8, 8], strides = [1, 1]} : vector<8x128xf32> to vector<8x8xf32>
    %9 = vector.extract_strided_slice %0 {offsets = [0, 96], sizes = [8, 8], strides = [1, 1]} : vector<8x128xf32> to vector<8x8xf32>
    %10 = vector.extract_strided_slice %1 {offsets = [0, 0, 0], sizes = [8, 8, 32], strides = [1, 1, 1]} : vector<8x16x32xf32> to vector<8x8x32xf32>
    %11 = vector.extract_strided_slice %1 {offsets = [0, 8, 0], sizes = [8, 8, 32], strides = [1, 1, 1]} : vector<8x16x32xf32> to vector<8x8x32xf32>
    %c0_6 = arith.constant 0 : index
    %c0_7 = arith.constant 0 : index
    %12 = vector.load %arg2[%c0_6, %c0_7] : memref<432x32xf32, #tpu.memory_space<vmem>>, vector<64x32xf32>
    %cst = arith.constant dense<0.000000e+00> : vector<8x32xf32>
    %13 = tpu.matmul %4, %12, %cst {dimension_numbers = #tpu.dot_dimension_numbers<[1], [0], [0], [1], [0, 0, 1, 1], [], []>} : vector<8x64xf32>, vector<64x32xf32>, vector<8x32xf32> -> vector<8x32xf32>
    %14 = vector.extract_strided_slice %2 {offsets = [0, 0], sizes = [1, 32], strides = [1, 1]} : vector<16x32xf32> to vector<1x32xf32>
    %15 = vector.broadcast %14 : vector<1x32xf32> to vector<8x32xf32>
    %16 = arith.addf %13, %15 : vector<8x32xf32>
    %cst_8 = arith.constant 0.000000e+00 : f32
    %17 = vector.broadcast %cst_8 : f32 to vector<8x32xf32>
    %18 = arith.maximumf %16, %17 : vector<8x32xf32>
    %c64 = arith.constant 64 : index
    %c0_9 = arith.constant 0 : index
    %19 = vector.load %arg2[%c64, %c0_9] : memref<432x32xf32, #tpu.memory_space<vmem>>, vector<32x8xf32>
    %cst_10 = arith.constant dense<0.000000e+00> : vector<8x8xf32>
    %20 = tpu.matmul %18, %19, %cst_10 {dimension_numbers = #tpu.dot_dimension_numbers<[1], [0], [0], [1], [0, 0, 1, 1], [], []>} : vector<8x32xf32>, vector<32x8xf32>, vector<8x8xf32> -> vector<8x8xf32>
    %21 = vector.extract_strided_slice %2 {offsets = [1, 0], sizes = [1, 8], strides = [1, 1]} : vector<16x32xf32> to vector<1x8xf32>
    %22 = vector.broadcast %21 : vector<1x8xf32> to vector<8x8xf32>
    %23 = arith.addf %20, %22 : vector<8x8xf32>
    %cst_11 = arith.constant 0.000000e+00 : f32
    %24 = vector.broadcast %cst_11 : f32 to vector<8x8xf32>
    %25 = arith.cmpf ogt, %5, %24 : vector<8x8xf32>
    %cst_12 = arith.constant -1.000000e+30 : f32
    %26 = vector.broadcast %cst_12 : f32 to vector<8x8xf32>
    %27 = arith.select %25, %23, %26 : vector<8x8xi1>, vector<8x8xf32>
    %cst_13 = arith.constant dense<0xFF800000> : vector<8xf32>
    %28 = vector.multi_reduction <maximumf>, %27, %cst_13 [1] : vector<8x8xf32> to vector<8xf32>
    %29 = vector.shape_cast %28 : vector<8xf32> to vector<8x1xf32>
    %30 = vector.broadcast %29 : vector<8x1xf32> to vector<8x8xf32>
    %31 = arith.subf %27, %30 : vector<8x8xf32>
    %32 = math.exp %31 : vector<8x8xf32>
    %cst_14 = arith.constant dense<0.000000e+00> : vector<8xf32>
    %33 = vector.multi_reduction <add>, %32, %cst_14 [1] : vector<8x8xf32> to vector<8xf32>
    %34 = vector.shape_cast %33 : vector<8xf32> to vector<8x1xf32>
    %35 = tpu.reciprocal %34 {approx = true} : vector<8x1xf32> -> vector<8x1xf32>
    %36 = vector.broadcast %35 : vector<8x1xf32> to vector<8x8xf32>
    %37 = arith.mulf %32, %36 : vector<8x8xf32>
    %38 = tpu.iota {dimensions = array<i32: 1>} : vector<8x8xi32>
    %39 = vector.broadcast %29 : vector<8x1xf32> to vector<8x8xf32>
    %40 = arith.cmpf oeq, %27, %39 : vector<8x8xf32>
    %c8_i32 = arith.constant 8 : i32
    %41 = vector.broadcast %c8_i32 : i32 to vector<8x8xi32>
    %42 = arith.select %40, %38, %41 : vector<8x8xi1>, vector<8x8xi32>
    %cst_15 = arith.constant dense<2147483647> : vector<8xi32>
    %43 = vector.multi_reduction <minsi>, %42, %cst_15 [1] : vector<8x8xi32> to vector<8xi32>
    %44 = vector.shape_cast %43 : vector<8xi32> to vector<8x1xi32>
    %45 = tpu.iota {dimensions = array<i32: 1>} : vector<8x8xi32>
    %46 = vector.broadcast %44 : vector<8x1xi32> to vector<8x8xi32>
    %47 = arith.cmpi eq, %45, %46 : vector<8x8xi32>
    %48 = arith.extui %47 : vector<8x8xi1> to vector<8x8xi32>
    %49 = arith.sitofp %48 : vector<8x8xi32> to vector<8x8xf32>
    %c96 = arith.constant 96 : index
    %c0_16 = arith.constant 0 : index
    %50 = vector.load %arg2[%c96, %c0_16] : memref<432x32xf32, #tpu.memory_space<vmem>>, vector<8x32xf32>
    %cst_17 = arith.constant dense<0.000000e+00> : vector<8x32xf32>
    %51 = tpu.matmul %49, %50, %cst_17 {dimension_numbers = #tpu.dot_dimension_numbers<[1], [0], [0], [1], [0, 0, 1, 1], [], []>} : vector<8x8xf32>, vector<8x32xf32>, vector<8x32xf32> -> vector<8x32xf32>
    %52 = arith.addf %3, %51 : vector<8x32xf32>
    %c104 = arith.constant 104 : index
    %c0_18 = arith.constant 0 : index
    %53 = vector.load %arg2[%c104, %c0_18] : memref<432x32xf32, #tpu.memory_space<vmem>>, vector<32x32xf32>
    %cst_19 = arith.constant dense<0.000000e+00> : vector<8x32xf32>
    %54 = tpu.matmul %52, %53, %cst_19 {dimension_numbers = #tpu.dot_dimension_numbers<[1], [0], [0], [1], [0, 0, 1, 1], [], []>} : vector<8x32xf32>, vector<32x32xf32>, vector<8x32xf32> -> vector<8x32xf32>
    %55 = vector.extract_strided_slice %2 {offsets = [2, 0], sizes = [1, 32], strides = [1, 1]} : vector<16x32xf32> to vector<1x32xf32>
    %56 = vector.broadcast %55 : vector<1x32xf32> to vector<8x32xf32>
    %57 = arith.addf %54, %56 : vector<8x32xf32>
    %cst_20 = arith.constant 0.000000e+00 : f32
    %58 = vector.broadcast %cst_20 : f32 to vector<8x32xf32>
    %59 = arith.maximumf %57, %58 : vector<8x32xf32>
    %c136 = arith.constant 136 : index
    %c0_21 = arith.constant 0 : index
    %60 = vector.load %arg2[%c136, %c0_21] : memref<432x32xf32, #tpu.memory_space<vmem>>, vector<32x32xf32>
    %cst_22 = arith.constant dense<0.000000e+00> : vector<8x32xf32>
    %61 = tpu.matmul %59, %60, %cst_22 {dimension_numbers = #tpu.dot_dimension_numbers<[1], [0], [0], [1], [0, 0, 1, 1], [], []>} : vector<8x32xf32>, vector<32x32xf32>, vector<8x32xf32> -> vector<8x32xf32>
    %62 = vector.extract_strided_slice %2 {offsets = [3, 0], sizes = [1, 32], strides = [1, 1]} : vector<16x32xf32> to vector<1x32xf32>
    %63 = vector.broadcast %62 : vector<1x32xf32> to vector<8x32xf32>
    %64 = arith.addf %61, %63 : vector<8x32xf32>
    %65 = vector.shape_cast %64 : vector<8x32xf32> to vector<8x1x32xf32>
    %66 = vector.broadcast %65 : vector<8x1x32xf32> to vector<8x8x32xf32>
    %67 = arith.mulf %66, %10 : vector<8x8x32xf32>
    %cst_23 = arith.constant dense<0.000000e+00> : vector<8x8xf32>
    %68 = vector.multi_reduction <add>, %67, %cst_23 [2] : vector<8x8x32xf32> to vector<8x8xf32>
    %cst_24 = arith.constant 0.000000e+00 : f32
    %69 = vector.broadcast %cst_24 : f32 to vector<8x8xf32>
    %70 = arith.cmpf ogt, %6, %69 : vector<8x8xf32>
    %cst_25 = arith.constant -1.000000e+30 : f32
    %71 = vector.broadcast %cst_25 : f32 to vector<8x8xf32>
    %72 = arith.select %70, %68, %71 : vector<8x8xi1>, vector<8x8xf32>
    %cst_26 = arith.constant dense<0xFF800000> : vector<8xf32>
    %73 = vector.multi_reduction <maximumf>, %72, %cst_26 [1] : vector<8x8xf32> to vector<8xf32>
    %74 = vector.shape_cast %73 : vector<8xf32> to vector<8x1xf32>
    %75 = vector.broadcast %74 : vector<8x1xf32> to vector<8x8xf32>
    %76 = arith.subf %72, %75 : vector<8x8xf32>
    %77 = math.exp %76 : vector<8x8xf32>
    %cst_27 = arith.constant dense<0.000000e+00> : vector<8xf32>
    %78 = vector.multi_reduction <add>, %77, %cst_27 [1] : vector<8x8xf32> to vector<8xf32>
    %79 = vector.shape_cast %78 : vector<8xf32> to vector<8x1xf32>
    %80 = tpu.reciprocal %79 {approx = true} : vector<8x1xf32> -> vector<8x1xf32>
    %81 = vector.broadcast %80 : vector<8x1xf32> to vector<8x8xf32>
    %82 = arith.mulf %77, %81 : vector<8x8xf32>
    %83 = tpu.iota {dimensions = array<i32: 1>} : vector<8x8xi32>
    %84 = vector.broadcast %74 : vector<8x1xf32> to vector<8x8xf32>
    %85 = arith.cmpf oeq, %72, %84 : vector<8x8xf32>
    %c8_i32_28 = arith.constant 8 : i32
    %86 = vector.broadcast %c8_i32_28 : i32 to vector<8x8xi32>
    %87 = arith.select %85, %83, %86 : vector<8x8xi1>, vector<8x8xi32>
    %cst_29 = arith.constant dense<2147483647> : vector<8xi32>
    %88 = vector.multi_reduction <minsi>, %87, %cst_29 [1] : vector<8x8xi32> to vector<8xi32>
    %89 = vector.shape_cast %88 : vector<8xi32> to vector<8x1xi32>
    %90 = tpu.iota {dimensions = array<i32: 1>} : vector<8x8xi32>
    %91 = vector.broadcast %89 : vector<8x1xi32> to vector<8x8xi32>
    %92 = arith.cmpi eq, %90, %91 : vector<8x8xi32>
    %93 = arith.extui %92 : vector<8x8xi1> to vector<8x8xi32>
    %94 = arith.sitofp %93 : vector<8x8xi32> to vector<8x8xf32>
    %95 = vector.shape_cast %94 : vector<8x8xf32> to vector<8x8x1xf32>
    %96 = vector.broadcast %95 : vector<8x8x1xf32> to vector<8x8x32xf32>
    %97 = arith.mulf %96, %10 : vector<8x8x32xf32>
    %cst_30 = arith.constant dense<0.000000e+00> : vector<8x32xf32>
    %98 = vector.multi_reduction <add>, %97, %cst_30 [1] : vector<8x8x32xf32> to vector<8x32xf32>
    %c0_i32 = arith.constant 0 : i32
    %99 = vector.broadcast %c0_i32 : i32 to vector<8x1xi32>
    %100 = arith.cmpi eq, %44, %99 : vector<8x1xi32>
    %101 = arith.extui %100 : vector<8x1xi1> to vector<8x1xi32>
    %102 = arith.sitofp %101 : vector<8x1xi32> to vector<8x1xf32>
    %c168 = arith.constant 168 : index
    %c0_31 = arith.constant 0 : index
    %103 = vector.load %arg2[%c168, %c0_31] : memref<432x32xf32, #tpu.memory_space<vmem>>, vector<32x32xf32>
    %cst_32 = arith.constant dense<0.000000e+00> : vector<8x32xf32>
    %104 = tpu.matmul %98, %103, %cst_32 {dimension_numbers = #tpu.dot_dimension_numbers<[1], [0], [0], [1], [0, 0, 1, 1], [], []>} : vector<8x32xf32>, vector<32x32xf32>, vector<8x32xf32> -> vector<8x32xf32>
    %105 = vector.extract_strided_slice %2 {offsets = [4, 0], sizes = [1, 32], strides = [1, 1]} : vector<16x32xf32> to vector<1x32xf32>
    %106 = vector.broadcast %105 : vector<1x32xf32> to vector<8x32xf32>
    %107 = arith.addf %104, %106 : vector<8x32xf32>
    %108 = vector.broadcast %102 : vector<8x1xf32> to vector<8x32xf32>
    %109 = arith.mulf %108, %107 : vector<8x32xf32>
    %110 = arith.addf %52, %109 : vector<8x32xf32>
    %c200 = arith.constant 200 : index
    %c0_33 = arith.constant 0 : index
    %111 = vector.load %arg2[%c200, %c0_33] : memref<432x32xf32, #tpu.memory_space<vmem>>, vector<32x32xf32>
    %cst_34 = arith.constant dense<0.000000e+00> : vector<8x32xf32>
    %112 = tpu.matmul %110, %111, %cst_34 {dimension_numbers = #tpu.dot_dimension_numbers<[1], [0], [0], [1], [0, 0, 1, 1], [], []>} : vector<8x32xf32>, vector<32x32xf32>, vector<8x32xf32> -> vector<8x32xf32>
    %113 = vector.extract_strided_slice %2 {offsets = [5, 0], sizes = [1, 32], strides = [1, 1]} : vector<16x32xf32> to vector<1x32xf32>
    %114 = vector.broadcast %113 : vector<1x32xf32> to vector<8x32xf32>
    %115 = arith.addf %112, %114 : vector<8x32xf32>
    %cst_35 = arith.constant 0.000000e+00 : f32
    %116 = vector.broadcast %cst_35 : f32 to vector<8x32xf32>
    %117 = arith.maximumf %115, %116 : vector<8x32xf32>
    %c232 = arith.constant 232 : index
    %c0_36 = arith.constant 0 : index
    %118 = vector.load %arg2[%c232, %c0_36] : memref<432x32xf32, #tpu.memory_space<vmem>>, vector<32x32xf32>
    %cst_37 = arith.constant dense<0.000000e+00> : vector<8x32xf32>
    %119 = tpu.matmul %117, %118, %cst_37 {dimension_numbers = #tpu.dot_dimension_numbers<[1], [0], [0], [1], [0, 0, 1, 1], [], []>} : vector<8x32xf32>, vector<32x32xf32>, vector<8x32xf32> -> vector<8x32xf32>
    %120 = vector.extract_strided_slice %2 {offsets = [6, 0], sizes = [1, 32], strides = [1, 1]} : vector<16x32xf32> to vector<1x32xf32>
    %121 = vector.broadcast %120 : vector<1x32xf32> to vector<8x32xf32>
    %122 = arith.addf %119, %121 : vector<8x32xf32>
    %123 = vector.shape_cast %122 : vector<8x32xf32> to vector<8x1x32xf32>
    %124 = vector.broadcast %123 : vector<8x1x32xf32> to vector<8x8x32xf32>
    %125 = arith.mulf %124, %11 : vector<8x8x32xf32>
    %cst_38 = arith.constant dense<0.000000e+00> : vector<8x8xf32>
    %126 = vector.multi_reduction <add>, %125, %cst_38 [2] : vector<8x8x32xf32> to vector<8x8xf32>
    %cst_39 = arith.constant 0.000000e+00 : f32
    %127 = vector.broadcast %cst_39 : f32 to vector<8x8xf32>
    %128 = arith.cmpf ogt, %7, %127 : vector<8x8xf32>
    %cst_40 = arith.constant -1.000000e+30 : f32
    %129 = vector.broadcast %cst_40 : f32 to vector<8x8xf32>
    %130 = arith.select %128, %126, %129 : vector<8x8xi1>, vector<8x8xf32>
    %cst_41 = arith.constant dense<0xFF800000> : vector<8xf32>
    %131 = vector.multi_reduction <maximumf>, %130, %cst_41 [1] : vector<8x8xf32> to vector<8xf32>
    %132 = vector.shape_cast %131 : vector<8xf32> to vector<8x1xf32>
    %133 = vector.broadcast %132 : vector<8x1xf32> to vector<8x8xf32>
    %134 = arith.subf %130, %133 : vector<8x8xf32>
    %135 = math.exp %134 : vector<8x8xf32>
    %cst_42 = arith.constant dense<0.000000e+00> : vector<8xf32>
    %136 = vector.multi_reduction <add>, %135, %cst_42 [1] : vector<8x8xf32> to vector<8xf32>
    %137 = vector.shape_cast %136 : vector<8xf32> to vector<8x1xf32>
    %138 = tpu.reciprocal %137 {approx = true} : vector<8x1xf32> -> vector<8x1xf32>
    %139 = vector.broadcast %138 : vector<8x1xf32> to vector<8x8xf32>
    %140 = arith.mulf %135, %139 : vector<8x8xf32>
    %141 = tpu.iota {dimensions = array<i32: 1>} : vector<8x8xi32>
    %142 = vector.broadcast %132 : vector<8x1xf32> to vector<8x8xf32>
    %143 = arith.cmpf oeq, %130, %142 : vector<8x8xf32>
    %c8_i32_43 = arith.constant 8 : i32
    %144 = vector.broadcast %c8_i32_43 : i32 to vector<8x8xi32>
    %145 = arith.select %143, %141, %144 : vector<8x8xi1>, vector<8x8xi32>
    %cst_44 = arith.constant dense<2147483647> : vector<8xi32>
    %146 = vector.multi_reduction <minsi>, %145, %cst_44 [1] : vector<8x8xi32> to vector<8xi32>
    %147 = vector.shape_cast %146 : vector<8xi32> to vector<8x1xi32>
    %148 = tpu.iota {dimensions = array<i32: 1>} : vector<8x8xi32>
    %149 = vector.broadcast %147 : vector<8x1xi32> to vector<8x8xi32>
    %150 = arith.cmpi eq, %148, %149 : vector<8x8xi32>
    %151 = arith.extui %150 : vector<8x8xi1> to vector<8x8xi32>
    %152 = arith.sitofp %151 : vector<8x8xi32> to vector<8x8xf32>
    %153 = vector.shape_cast %152 : vector<8x8xf32> to vector<8x8x1xf32>
    %154 = vector.broadcast %153 : vector<8x8x1xf32> to vector<8x8x32xf32>
    %155 = arith.mulf %154, %11 : vector<8x8x32xf32>
    %cst_45 = arith.constant dense<0.000000e+00> : vector<8x32xf32>
    %156 = vector.multi_reduction <add>, %155, %cst_45 [1] : vector<8x8x32xf32> to vector<8x32xf32>
    %c1_i32 = arith.constant 1 : i32
    %157 = vector.broadcast %c1_i32 : i32 to vector<8x1xi32>
    %158 = arith.cmpi eq, %44, %157 : vector<8x1xi32>
    %159 = arith.extui %158 : vector<8x1xi1> to vector<8x1xi32>
    %160 = arith.sitofp %159 : vector<8x1xi32> to vector<8x1xf32>
    %c264 = arith.constant 264 : index
    %c0_46 = arith.constant 0 : index
    %161 = vector.load %arg2[%c264, %c0_46] : memref<432x32xf32, #tpu.memory_space<vmem>>, vector<32x32xf32>
    %cst_47 = arith.constant dense<0.000000e+00> : vector<8x32xf32>
    %162 = tpu.matmul %156, %161, %cst_47 {dimension_numbers = #tpu.dot_dimension_numbers<[1], [0], [0], [1], [0, 0, 1, 1], [], []>} : vector<8x32xf32>, vector<32x32xf32>, vector<8x32xf32> -> vector<8x32xf32>
    %163 = vector.extract_strided_slice %2 {offsets = [7, 0], sizes = [1, 32], strides = [1, 1]} : vector<16x32xf32> to vector<1x32xf32>
    %164 = vector.broadcast %163 : vector<1x32xf32> to vector<8x32xf32>
    %165 = arith.addf %162, %164 : vector<8x32xf32>
    %166 = vector.broadcast %160 : vector<8x1xf32> to vector<8x32xf32>
    %167 = arith.mulf %166, %165 : vector<8x32xf32>
    %168 = arith.addf %110, %167 : vector<8x32xf32>
    %c296 = arith.constant 296 : index
    %c0_48 = arith.constant 0 : index
    %169 = vector.load %arg2[%c296, %c0_48] : memref<432x32xf32, #tpu.memory_space<vmem>>, vector<32x32xf32>
    %cst_49 = arith.constant dense<0.000000e+00> : vector<8x32xf32>
    %170 = tpu.matmul %168, %169, %cst_49 {dimension_numbers = #tpu.dot_dimension_numbers<[1], [0], [0], [1], [0, 0, 1, 1], [], []>} : vector<8x32xf32>, vector<32x32xf32>, vector<8x32xf32> -> vector<8x32xf32>
    %171 = vector.extract_strided_slice %2 {offsets = [8, 0], sizes = [1, 32], strides = [1, 1]} : vector<16x32xf32> to vector<1x32xf32>
    %172 = vector.broadcast %171 : vector<1x32xf32> to vector<8x32xf32>
    %173 = arith.addf %170, %172 : vector<8x32xf32>
    %cst_50 = arith.constant 0.000000e+00 : f32
    %174 = vector.broadcast %cst_50 : f32 to vector<8x32xf32>
    %175 = arith.maximumf %173, %174 : vector<8x32xf32>
    %c328 = arith.constant 328 : index
    %c0_51 = arith.constant 0 : index
    %176 = vector.load %arg2[%c328, %c0_51] : memref<432x32xf32, #tpu.memory_space<vmem>>, vector<32x8xf32>
    %cst_52 = arith.constant dense<0.000000e+00> : vector<8x8xf32>
    %177 = tpu.matmul %175, %176, %cst_52 {dimension_numbers = #tpu.dot_dimension_numbers<[1], [0], [0], [1], [0, 0, 1, 1], [], []>} : vector<8x32xf32>, vector<32x8xf32>, vector<8x8xf32> -> vector<8x8xf32>
    %178 = vector.extract_strided_slice %2 {offsets = [9, 0], sizes = [1, 8], strides = [1, 1]} : vector<16x32xf32> to vector<1x8xf32>
    %179 = vector.broadcast %178 : vector<1x8xf32> to vector<8x8xf32>
    %180 = arith.addf %177, %179 : vector<8x8xf32>
    %cst_53 = arith.constant 0.000000e+00 : f32
    %181 = vector.broadcast %cst_53 : f32 to vector<8x8xf32>
    %182 = arith.cmpf ogt, %8, %181 : vector<8x8xf32>
    %cst_54 = arith.constant -1.000000e+30 : f32
    %183 = vector.broadcast %cst_54 : f32 to vector<8x8xf32>
    %184 = arith.select %182, %180, %183 : vector<8x8xi1>, vector<8x8xf32>
    %cst_55 = arith.constant dense<0xFF800000> : vector<8xf32>
    %185 = vector.multi_reduction <maximumf>, %184, %cst_55 [1] : vector<8x8xf32> to vector<8xf32>
    %186 = vector.shape_cast %185 : vector<8xf32> to vector<8x1xf32>
    %187 = vector.broadcast %186 : vector<8x1xf32> to vector<8x8xf32>
    %188 = arith.subf %184, %187 : vector<8x8xf32>
    %189 = math.exp %188 : vector<8x8xf32>
    %cst_56 = arith.constant dense<0.000000e+00> : vector<8xf32>
    %190 = vector.multi_reduction <add>, %189, %cst_56 [1] : vector<8x8xf32> to vector<8xf32>
    %191 = vector.shape_cast %190 : vector<8xf32> to vector<8x1xf32>
    %192 = tpu.reciprocal %191 {approx = true} : vector<8x1xf32> -> vector<8x1xf32>
    %193 = vector.broadcast %192 : vector<8x1xf32> to vector<8x8xf32>
    %194 = arith.mulf %189, %193 : vector<8x8xf32>
    %195 = tpu.iota {dimensions = array<i32: 1>} : vector<8x8xi32>
    %196 = vector.broadcast %186 : vector<8x1xf32> to vector<8x8xf32>
    %197 = arith.cmpf oeq, %184, %196 : vector<8x8xf32>
    %c8_i32_57 = arith.constant 8 : i32
    %198 = vector.broadcast %c8_i32_57 : i32 to vector<8x8xi32>
    %199 = arith.select %197, %195, %198 : vector<8x8xi1>, vector<8x8xi32>
    %cst_58 = arith.constant dense<2147483647> : vector<8xi32>
    %200 = vector.multi_reduction <minsi>, %199, %cst_58 [1] : vector<8x8xi32> to vector<8xi32>
    %201 = vector.shape_cast %200 : vector<8xi32> to vector<8x1xi32>
    %202 = tpu.iota {dimensions = array<i32: 1>} : vector<8x8xi32>
    %203 = vector.broadcast %201 : vector<8x1xi32> to vector<8x8xi32>
    %204 = arith.cmpi eq, %202, %203 : vector<8x8xi32>
    %205 = arith.extui %204 : vector<8x8xi1> to vector<8x8xi32>
    %206 = arith.sitofp %205 : vector<8x8xi32> to vector<8x8xf32>
    %c360 = arith.constant 360 : index
    %c0_59 = arith.constant 0 : index
    %207 = vector.load %arg2[%c360, %c0_59] : memref<432x32xf32, #tpu.memory_space<vmem>>, vector<8x32xf32>
    %cst_60 = arith.constant dense<0.000000e+00> : vector<8x32xf32>
    %208 = tpu.matmul %206, %207, %cst_60 {dimension_numbers = #tpu.dot_dimension_numbers<[1], [0], [0], [1], [0, 0, 1, 1], [], []>} : vector<8x8xf32>, vector<8x32xf32>, vector<8x32xf32> -> vector<8x32xf32>
    %209 = arith.addf %168, %208 : vector<8x32xf32>
    %c368 = arith.constant 368 : index
    %c0_61 = arith.constant 0 : index
    %210 = vector.load %arg2[%c368, %c0_61] : memref<432x32xf32, #tpu.memory_space<vmem>>, vector<32x32xf32>
    %cst_62 = arith.constant dense<0.000000e+00> : vector<8x32xf32>
    %211 = tpu.matmul %209, %210, %cst_62 {dimension_numbers = #tpu.dot_dimension_numbers<[1], [0], [0], [1], [0, 0, 1, 1], [], []>} : vector<8x32xf32>, vector<32x32xf32>, vector<8x32xf32> -> vector<8x32xf32>
    %212 = vector.extract_strided_slice %2 {offsets = [10, 0], sizes = [1, 32], strides = [1, 1]} : vector<16x32xf32> to vector<1x32xf32>
    %213 = vector.broadcast %212 : vector<1x32xf32> to vector<8x32xf32>
    %214 = arith.addf %211, %213 : vector<8x32xf32>
    %cst_63 = arith.constant 0.000000e+00 : f32
    %215 = vector.broadcast %cst_63 : f32 to vector<8x32xf32>
    %216 = arith.maximumf %214, %215 : vector<8x32xf32>
    %c400 = arith.constant 400 : index
    %c0_64 = arith.constant 0 : index
    %217 = vector.load %arg2[%c400, %c0_64] : memref<432x32xf32, #tpu.memory_space<vmem>>, vector<32x32xf32>
    %cst_65 = arith.constant dense<0.000000e+00> : vector<8x32xf32>
    %218 = tpu.matmul %216, %217, %cst_65 {dimension_numbers = #tpu.dot_dimension_numbers<[1], [0], [0], [1], [0, 0, 1, 1], [], []>} : vector<8x32xf32>, vector<32x32xf32>, vector<8x32xf32> -> vector<8x32xf32>
    %219 = vector.extract_strided_slice %2 {offsets = [11, 0], sizes = [1, 32], strides = [1, 1]} : vector<16x32xf32> to vector<1x32xf32>
    %220 = vector.broadcast %219 : vector<1x32xf32> to vector<8x32xf32>
    %221 = arith.addf %218, %220 : vector<8x32xf32>
    %222 = vector.shape_cast %221 : vector<8x32xf32> to vector<8x1x32xf32>
    %223 = vector.broadcast %222 : vector<8x1x32xf32> to vector<8x8x32xf32>
    %224 = arith.mulf %223, %10 : vector<8x8x32xf32>
    %cst_66 = arith.constant dense<0.000000e+00> : vector<8x8xf32>
    %225 = vector.multi_reduction <add>, %224, %cst_66 [2] : vector<8x8x32xf32> to vector<8x8xf32>
    %cst_67 = arith.constant 0.000000e+00 : f32
    %226 = vector.broadcast %cst_67 : f32 to vector<8x8xf32>
    %227 = arith.cmpf ogt, %9, %226 : vector<8x8xf32>
    %cst_68 = arith.constant -1.000000e+30 : f32
    %228 = vector.broadcast %cst_68 : f32 to vector<8x8xf32>
    %229 = arith.select %227, %225, %228 : vector<8x8xi1>, vector<8x8xf32>
    %cst_69 = arith.constant dense<0xFF800000> : vector<8xf32>
    %230 = vector.multi_reduction <maximumf>, %229, %cst_69 [1] : vector<8x8xf32> to vector<8xf32>
    %231 = vector.shape_cast %230 : vector<8xf32> to vector<8x1xf32>
    %232 = vector.broadcast %231 : vector<8x1xf32> to vector<8x8xf32>
    %233 = arith.subf %229, %232 : vector<8x8xf32>
    %234 = math.exp %233 : vector<8x8xf32>
    %cst_70 = arith.constant dense<0.000000e+00> : vector<8xf32>
    %235 = vector.multi_reduction <add>, %234, %cst_70 [1] : vector<8x8xf32> to vector<8xf32>
    %236 = vector.shape_cast %235 : vector<8xf32> to vector<8x1xf32>
    %237 = tpu.reciprocal %236 {approx = true} : vector<8x1xf32> -> vector<8x1xf32>
    %238 = vector.broadcast %237 : vector<8x1xf32> to vector<8x8xf32>
    %239 = arith.mulf %234, %238 : vector<8x8xf32>
    %240 = tpu.iota {dimensions = array<i32: 1>} : vector<8x8xi32>
    %241 = vector.broadcast %231 : vector<8x1xf32> to vector<8x8xf32>
    %242 = arith.cmpf oeq, %229, %241 : vector<8x8xf32>
    %c8_i32_71 = arith.constant 8 : i32
    %243 = vector.broadcast %c8_i32_71 : i32 to vector<8x8xi32>
    %244 = arith.select %242, %240, %243 : vector<8x8xi1>, vector<8x8xi32>
    %cst_72 = arith.constant dense<2147483647> : vector<8xi32>
    %245 = vector.multi_reduction <minsi>, %244, %cst_72 [1] : vector<8x8xi32> to vector<8xi32>
    %246 = vector.shape_cast %245 : vector<8xi32> to vector<8x1xi32>
    %cst_73 = arith.constant 0.000000e+00 : f32
    %247 = vector.broadcast %cst_73 : f32 to vector<8x128xf32>
    %c0_74 = arith.constant 0 : index
    %c0_75 = arith.constant 0 : index
    %248 = vector.load %arg4[%c0_74, %c0_75] : memref<8x128xf32, #tpu.memory_space<vmem>>, vector<8x128xf32>
    tpu.vector_store %arg4[%c0_74, %c0_75], %247 {strides = array<i32>} : memref<8x128xf32, #tpu.memory_space<vmem>>, vector<8x128xf32>,
    %c0_76 = arith.constant 0 : index
    %c0_77 = arith.constant 0 : index
    %249 = vector.load %arg4[%c0_76, %c0_77] : memref<8x128xf32, #tpu.memory_space<vmem>>, vector<8x8xf32>
    tpu.vector_store %arg4[%c0_76, %c0_77], %27 {strides = array<i32>} : memref<8x128xf32, #tpu.memory_space<vmem>>, vector<8x8xf32>,
    %c0_78 = arith.constant 0 : index
    %c8 = arith.constant 8 : index
    %250 = vector.load %arg4[%c0_78, %c8] : memref<8x128xf32, #tpu.memory_space<vmem>>, vector<8x8xf32>
    tpu.vector_store %arg4[%c0_78, %c8], %72 {strides = array<i32>} : memref<8x128xf32, #tpu.memory_space<vmem>>, vector<8x8xf32>,
    %c0_79 = arith.constant 0 : index
    %c16 = arith.constant 16 : index
    %251 = vector.load %arg4[%c0_79, %c16] : memref<8x128xf32, #tpu.memory_space<vmem>>, vector<8x8xf32>
    tpu.vector_store %arg4[%c0_79, %c16], %130 {strides = array<i32>} : memref<8x128xf32, #tpu.memory_space<vmem>>, vector<8x8xf32>,
    %c0_80 = arith.constant 0 : index
    %c24 = arith.constant 24 : index
    %252 = vector.load %arg4[%c0_80, %c24] : memref<8x128xf32, #tpu.memory_space<vmem>>, vector<8x8xf32>
    tpu.vector_store %arg4[%c0_80, %c24], %184 {strides = array<i32>} : memref<8x128xf32, #tpu.memory_space<vmem>>, vector<8x8xf32>,
    %c0_81 = arith.constant 0 : index
    %c32 = arith.constant 32 : index
    %253 = vector.load %arg4[%c0_81, %c32] : memref<8x128xf32, #tpu.memory_space<vmem>>, vector<8x8xf32>
    tpu.vector_store %arg4[%c0_81, %c32], %229 {strides = array<i32>} : memref<8x128xf32, #tpu.memory_space<vmem>>, vector<8x8xf32>,
    %c0_82 = arith.constant 0 : index
    %c64_83 = arith.constant 64 : index
    %254 = vector.load %arg4[%c0_82, %c64_83] : memref<8x128xf32, #tpu.memory_space<vmem>>, vector<8x8xf32>
    tpu.vector_store %arg4[%c0_82, %c64_83], %37 {strides = array<i32>} : memref<8x128xf32, #tpu.memory_space<vmem>>, vector<8x8xf32>,
    %c0_84 = arith.constant 0 : index
    %c72 = arith.constant 72 : index
    %255 = vector.load %arg4[%c0_84, %c72] : memref<8x128xf32, #tpu.memory_space<vmem>>, vector<8x8xf32>
    tpu.vector_store %arg4[%c0_84, %c72], %82 {strides = array<i32>} : memref<8x128xf32, #tpu.memory_space<vmem>>, vector<8x8xf32>,
    %c0_85 = arith.constant 0 : index
    %c80 = arith.constant 80 : index
    %256 = vector.load %arg4[%c0_85, %c80] : memref<8x128xf32, #tpu.memory_space<vmem>>, vector<8x8xf32>
    tpu.vector_store %arg4[%c0_85, %c80], %140 {strides = array<i32>} : memref<8x128xf32, #tpu.memory_space<vmem>>, vector<8x8xf32>,
    %c0_86 = arith.constant 0 : index
    %c88 = arith.constant 88 : index
    %257 = vector.load %arg4[%c0_86, %c88] : memref<8x128xf32, #tpu.memory_space<vmem>>, vector<8x8xf32>
    tpu.vector_store %arg4[%c0_86, %c88], %194 {strides = array<i32>} : memref<8x128xf32, #tpu.memory_space<vmem>>, vector<8x8xf32>,
    %c0_87 = arith.constant 0 : index
    %c96_88 = arith.constant 96 : index
    %258 = vector.load %arg4[%c0_87, %c96_88] : memref<8x128xf32, #tpu.memory_space<vmem>>, vector<8x8xf32>
    tpu.vector_store %arg4[%c0_87, %c96_88], %239 {strides = array<i32>} : memref<8x128xf32, #tpu.memory_space<vmem>>, vector<8x8xf32>,
    %c0_i32_89 = arith.constant 0 : i32
    %259 = vector.broadcast %c0_i32_89 : i32 to vector<8x8xi32>
    %c0_90 = arith.constant 0 : index
    %c0_91 = arith.constant 0 : index
    %260 = vector.load %arg5[%c0_90, %c0_91] : memref<8x8xi32, #tpu.memory_space<vmem>>, vector<8x8xi32>
    tpu.vector_store %arg5[%c0_90, %c0_91], %259 {strides = array<i32>} : memref<8x8xi32, #tpu.memory_space<vmem>>, vector<8x8xi32>,
    %c0_92 = arith.constant 0 : index
    %c0_93 = arith.constant 0 : index
    %261 = vector.load %arg5[%c0_92, %c0_93] : memref<8x8xi32, #tpu.memory_space<vmem>>, vector<8x1xi32>
    tpu.vector_store %arg5[%c0_92, %c0_93], %44 {strides = array<i32>} : memref<8x8xi32, #tpu.memory_space<vmem>>, vector<8x1xi32>,
    %c0_94 = arith.constant 0 : index
    %c1 = arith.constant 1 : index
    %262 = vector.load %arg5[%c0_94, %c1] : memref<8x8xi32, #tpu.memory_space<vmem>>, vector<8x1xi32>
    tpu.vector_store %arg5[%c0_94, %c1], %89 {strides = array<i32>} : memref<8x8xi32, #tpu.memory_space<vmem>>, vector<8x1xi32>,
    %c0_95 = arith.constant 0 : index
    %c2 = arith.constant 2 : index
    %263 = vector.load %arg5[%c0_95, %c2] : memref<8x8xi32, #tpu.memory_space<vmem>>, vector<8x1xi32>
    tpu.vector_store %arg5[%c0_95, %c2], %147 {strides = array<i32>} : memref<8x8xi32, #tpu.memory_space<vmem>>, vector<8x1xi32>,
    %c0_96 = arith.constant 0 : index
    %c3 = arith.constant 3 : index
    %264 = vector.load %arg5[%c0_96, %c3] : memref<8x8xi32, #tpu.memory_space<vmem>>, vector<8x1xi32>
    tpu.vector_store %arg5[%c0_96, %c3], %201 {strides = array<i32>} : memref<8x8xi32, #tpu.memory_space<vmem>>, vector<8x1xi32>,
    %c0_97 = arith.constant 0 : index
    %c4 = arith.constant 4 : index
    %265 = vector.load %arg5[%c0_97, %c4] : memref<8x8xi32, #tpu.memory_space<vmem>>, vector<8x1xi32>
    tpu.vector_store %arg5[%c0_97, %c4], %246 {strides = array<i32>} : memref<8x8xi32, #tpu.memory_space<vmem>>, vector<8x1xi32>,
    return
  }
}

</mosaic_0001>

<llo_original>
// kernel: policy_heads_forward.1
$region0: #{policy_heads_forward.1}
  #allocation0 [shape = 'u32[]', space=smem, size = 0x4, offset = 0x4, fixed_abs, tag = 'smem constant byte address 0x4 - core index']
  #allocation1 [shape = 'u32[144,128]{1,0:T(1,128)}', space=vmem, size = 0x12000, scoped, tag = 'internal scratch']
  %s0 = inlined_call_operand.vmem [shape: f32[8,128], index: 0, kind: input, shape index: {}]
  %s1 = inlined_call_operand.vmem [shape: f32[8,16,32], index: 1, kind: input, shape index: {}]
  %s2 = inlined_call_operand.vmem [shape: f32[432,32], index: 2, kind: input, shape index: {}]
  %s3 = inlined_call_operand.vmem [shape: f32[16,32], index: 3, kind: input, shape index: {}]
  %s4 = inlined_call_operand.vmem [shape: f32[8,128], index: 4, kind: output, shape index: {0}]
  %s5 = inlined_call_operand.vmem [shape: s32[8,8], index: 5, kind: output, shape index: {1}]
  %6 = xla_tuple %s4, %s5
  %s7 = sld [smem:[#allocation0]]
  $region34: #{policy_heads_forward.1} parent=0
    _
  %s9 = ssub.s32 1, %s7
  %s10 = scalar_select 0, %s9, %s7
  // Predicated region
  $region2: #{policy_heads_forward.1} parent=0 // pred_check
    _
  $region3: #{policy_heads_forward.1} parent=0 // pred_check_branch
    %12 = sbr.rel (0) target = $region5
  $region4: #{policy_heads_forward.1} parent=0 // pred_region
    _
  $region5: #{policy_heads_forward.1} parent=0 // pred_fallthru
    _
  // Predicated region
  $region6: #{policy_heads_forward.1} parent=0 // pred_check
    _
  $region7: #{policy_heads_forward.1} parent=0 // pred_check_branch
    %14 = sbr.rel (0) target = $region9
  $region8: #{policy_heads_forward.1} parent=0 // pred_region
    _
  $region9: #{policy_heads_forward.1} parent=0 // pred_fallthru
    _
  // Predicated region
  $region10: #{policy_heads_forward.1} parent=0 // pred_check
    _
  $region11: #{policy_heads_forward.1} parent=0 // pred_check_branch
    %16 = sbr.rel (0) target = $region13
  $region12: #{policy_heads_forward.1} parent=0 // pred_region
    _
  $region13: #{policy_heads_forward.1} parent=0 // pred_fallthru
    _
  // Predicated region
  $region14: #{policy_heads_forward.1} parent=0 // pred_check
    _
  $region15: #{policy_heads_forward.1} parent=0 // pred_check_branch
    %18 = sbr.rel (0) target = $region17
  $region16: #{policy_heads_forward.1} parent=0 // pred_region
    _
  $region17: #{policy_heads_forward.1} parent=0 // pred_fallthru
    _
  %v19 = vld [vmem:[%s0] sm:$0xff]
  %v20 = vld [vmem:[%s1] sm:$0xff]
  %v21 = vld [vmem:[%s1 + $0x8] sm:$0xff]
  %v22 = vld [vmem:[%s1 + $0x10] sm:$0xff]
  %v23 = vld [vmem:[%s1 + $0x18] sm:$0xff]
  %v24 = vld [vmem:[%s1 + $0x20] sm:$0xff]
  %v25 = vld [vmem:[%s1 + $0x28] sm:$0xff]
  %v26 = vld [vmem:[%s1 + $0x30] sm:$0xff]
  %v27 = vld [vmem:[%s1 + $0x38] sm:$0xff]
  %v28 = vld [vmem:[%s1 + $0x40] sm:$0xff]
  %v29 = vld [vmem:[%s1 + $0x48] sm:$0xff]
  %v30 = vld [vmem:[%s1 + $0x50] sm:$0xff]
  %v31 = vld [vmem:[%s1 + $0x58] sm:$0xff]
  %v32 = vld [vmem:[%s1 + $0x60] sm:$0xff]
  %v33 = vld [vmem:[%s1 + $0x68] sm:$0xff]
  %v34 = vld [vmem:[%s1 + $0x70] sm:$0xff]
  %v35 = vld [vmem:[%s1 + $0x78] sm:$0xff]
  %v36 = vld [vmem:[%s3] sm:$0xff]
  %v37 = vld [vmem:[%s3 + $0x8] sm:$0xff]
  %v38 = vld [vmem:[%s2] sm:$0xff]
  %v39 = vld [vmem:[%s2 + $0x8] sm:$0xff]
  %v40 = vld [vmem:[%s2 + $0x10] sm:$0xff]
  %v41 = vld [vmem:[%s2 + $0x18] sm:$0xff]
  %v42 = vld [vmem:[%s2 + $0x20] sm:$0xff]
  %v43 = vld [vmem:[%s2 + $0x28] sm:$0xff]
  %v44 = vld [vmem:[%s2 + $0x30] sm:$0xff]
  %v45 = vld [vmem:[%s2 + $0x38] sm:$0xff]
  %v46 = vlaneseq
  %v47 = vshrl.u32 %v46, 7
  %v48 = vsub.s32 0, %v47
  %v49 = vrot.slane %v36, %v48
  %vm50 = vcmask 523264
  %v52 = vsel %vm50, %v19, 0
  %54 = vmatprep.subr.mxu0 0.0
  %55 = vmatpush1.msra.mxu0 %v38
  %56 = vmatprep.subr.mxu0 0.0
  %57 = vmatpush1.msra.mxu0 %v39
  %58 = vmatprep.subr.mxu0 0.0
  %59 = vmatpush1.msra.mxu0 %v40
  %60 = vmatprep.subr.mxu0 0.0
  %61 = vmatpush1.msra.mxu0 %v41
  %62 = vmatprep.subr.mxu0 0.0
  %63 = vmatpush1.msra.mxu0 %v42
  %64 = vmatprep.subr.mxu0 0.0
  %65 = vmatpush1.msra.mxu0 %v43
  %66 = vmatprep.subr.mxu0 0.0
  %67 = vmatpush1.msra.mxu0 %v44
  %68 = vmatprep.subr.mxu0 0.0
  %69 = vmatpush1.msra.mxu0 %v45
  %70 = vmatprep.subr.mxu0 0.0
  %71 = vmatpush1.msra.mxu0 0.0
  %72 = vmatprep.subr.mxu0 0.0
  %73 = vmatpush1.msra.mxu0 0.0
  %74 = vmatprep.subr.mxu0 0.0
  %75 = vmatpush1.msra.mxu0 0.0
  %76 = vmatprep.subr.mxu0 0.0
  %77 = vmatpush1.msra.mxu0 0.0
  %78 = vmatprep.subr.mxu0 0.0
  %79 = vmatpush1.msra.mxu0 0.0
  %80 = vmatprep.subr.mxu0 0.0
  %81 = vmatpush1.msra.mxu0 0.0
  %82 = vmatprep.subr.mxu0 0.0
  %83 = vmatpush1.msra.mxu0 0.0
  %84 = vmatprep.subr.mxu0 0.0
  %85 = vmatpush1.msra.mxu0 0.0
  %86 = vmatprep.subr.mxu0 0.0
  %87 = vmatpush1.msra.mxu0 0.0
  %88 = vmatprep.subr.mxu0 0.0
  %89 = vmatpush1.msra.mxu0 0.0
  %90 = vmatprep.subr.mxu0 0.0
  %91 = vmatpush1.msra.mxu0 0.0
  %92 = vmatprep.subr.mxu0 0.0
  %93 = vmatpush1.msra.mxu0 0.0
  %94 = vmatprep.subr.mxu0 0.0
  %95 = vmatpush1.msra.mxu0 0.0
  %96 = vmatprep.subr.mxu0 0.0
  %97 = vmatpush1.msra.mxu0 0.0
  %98 = vmatprep.subr.mxu0 0.0
  %99 = vmatpush1.msra.mxu0 0.0
  %100 = vmatprep.subr.mxu0 0.0
  %101 = vmatpush1.msra.mxu0 0.0
  %102 = vmatprep.subr.mxu0 0.0
  %103 = vmatpush1.msra.mxu0 0.0
  %104 = vmatprep.subr.mxu0 0.0
  %105 = vmatpush1.msra.mxu0 0.0
  %106 = vmatprep.subr.mxu0 0.0
  %107 = vmatpush1.msra.mxu0 0.0
  %108 = vmatprep.subr.mxu0 0.0
  %109 = vmatpush1.msra.mxu0 0.0
  %110 = vmatprep.subr.mxu0 0.0
  %111 = vmatpush1.msra.mxu0 0.0
  %112 = vmatprep.subr.mxu0 0.0
  %113 = vmatpush1.msra.mxu0 0.0
  %114 = vmatprep.subr.mxu0 0.0
  %115 = vmatpush1.msra.mxu0 0.0
  %116 = vmatprep.subr.mxu0 0.0
  %117 = vmatpush1.msra.mxu0 0.0
  %118 = vmatprep.mubr.f32.mxu0 0.0
  %119 = vmatmul.mubr.f32.gmra.mrb[0].mxu0 %v52
  %v120 = vpop.f32.mrb[0].mxu0
  %v121 = vadd.f32 %v49, %v120
  %v122 = vpop.f32.mrb[0].mxu0
  %123 = vdwg.mxu0
  %v124 = vmax.f32 %v121, 0.0
  %v125 = vld [vmem:[%s2 + $0x40] sm:$0xff]
  %v126 = vld [vmem:[%s2 + $0x48] sm:$0xff]
  %v127 = vld [vmem:[%s2 + $0x50] sm:$0xff]
  %v128 = vld [vmem:[%s2 + $0x58] sm:$0xff]
  %v129 = vlaneseq
  %v130 = vshrl.u32 %v129, 7
  %v131 = vsub.s32 1, %v130
  %v132 = vrot.slane %v36, %v131
  %vm133 = vcmask 261120
  %v135 = vsel %vm133, %v124, 0
  %137 = vmatprep.subr.mxu0 0.0
  %138 = vmatpush1.msra.mxu0 %v125
  %139 = vmatprep.subr.mxu0 0.0
  %140 = vmatpush1.msra.mxu0 %v126
  %141 = vmatprep.subr.mxu0 0.0
  %142 = vmatpush1.msra.mxu0 %v127
  %143 = vmatprep.subr.mxu0 0.0
  %144 = vmatpush1.msra.mxu0 %v128
  %145 = vmatprep.subr.mxu0 0.0
  %146 = vmatpush1.msra.mxu0 0.0
  %147 = vmatprep.subr.mxu0 0.0
  %148 = vmatpush1.msra.mxu0 0.0
  %149 = vmatprep.subr.mxu0 0.0
  %150 = vmatpush1.msra.mxu0 0.0
  %151 = vmatprep.subr.mxu0 0.0
  %152 = vmatpush1.msra.mxu0 0.0
  %153 = vmatprep.subr.mxu0 0.0
  %154 = vmatpush1.msra.mxu0 0.0
  %155 = vmatprep.subr.mxu0 0.0
  %156 = vmatpush1.msra.mxu0 0.0
  %157 = vmatprep.subr.mxu0 0.0
  %158 = vmatpush1.msra.mxu0 0.0
  %159 = vmatprep.subr.mxu0 0.0
  %160 = vmatpush1.msra.mxu0 0.0
  %161 = vmatprep.subr.mxu0 0.0
  %162 = vmatpush1.msra.mxu0 0.0
  %163 = vmatprep.subr.mxu0 0.0
  %164 = vmatpush1.msra.mxu0 0.0
  %165 = vmatprep.subr.mxu0 0.0
  %166 = vmatpush1.msra.mxu0 0.0
  %167 = vmatprep.subr.mxu0 0.0
  %168 = vmatpush1.msra.mxu0 0.0
  %169 = vmatprep.subr.mxu0 0.0
  %170 = vmatpush1.msra.mxu0 0.0
  %171 = vmatprep.subr.mxu0 0.0
  %172 = vmatpush1.msra.mxu0 0.0
  %173 = vmatprep.subr.mxu0 0.0
  %174 = vmatpush1.msra.mxu0 0.0
  %175 = vmatprep.subr.mxu0 0.0
  %176 = vmatpush1.msra.mxu0 0.0
  %177 = vmatprep.subr.mxu0 0.0
  %178 = vmatpush1.msra.mxu0 0.0
  %179 = vmatprep.subr.mxu0 0.0
  %180 = vmatpush1.msra.mxu0 0.0
  %181 = vmatprep.subr.mxu0 0.0
  %182 = vmatpush1.msra.mxu0 0.0
  %183 = vmatprep.subr.mxu0 0.0
  %184 = vmatpush1.msra.mxu0 0.0
  %185 = vmatprep.subr.mxu0 0.0
  %186 = vmatpush1.msra.mxu0 0.0
  %187 = vmatprep.subr.mxu0 0.0
  %188 = vmatpush1.msra.mxu0 0.0
  %189 = vmatprep.subr.mxu0 0.0
  %190 = vmatpush1.msra.mxu0 0.0
  %191 = vmatprep.subr.mxu0 0.0
  %192 = vmatpush1.msra.mxu0 0.0
  %193 = vmatprep.subr.mxu0 0.0
  %194 = vmatpush1.msra.mxu0 0.0
  %195 = vmatprep.subr.mxu0 0.0
  %196 = vmatpush1.msra.mxu0 0.0
  %197 = vmatprep.subr.mxu0 0.0
  %198 = vmatpush1.msra.mxu0 0.0
  %199 = vmatprep.subr.mxu0 0.0
  %200 = vmatpush1.msra.mxu0 0.0
  %201 = vmatprep.mubr.f32.mxu0 0.0
  %202 = vmatmul.mubr.f32.gmra.mrb[0].mxu0 %v135
  %v203 = vpop.f32.mrb[0].mxu0
  %v204 = vadd.f32 %v132, %v203
  %v205 = vpop.f32.mrb[0].mxu0
  %206 = vdwg.mxu0
  %vm207 = vcmp.gt.f32.partialorder %v19, 0.0
  %209 = vrot.lane.b32.xlu0 %v204, 64
  %v210 = vpop.permute.xlu0 %209
  %v212 = vsel %vm207, %v210, -1e+30
  %vm213 = vcmask 589312
  %v214 = vsel %vm213, %v212, -inf
  %215 = vmax.xlane.f32.xlu0 %v214
  %v216 = vpop.xlane.xlu0 %215
  %v217 = vsub.f32 %v212, %v216
  %v218 = vmul.f32 %v217, 1.442695
  %v219 = vpow.pop %v218
  %221 = vrot.lane.b32.xlu0 %v219, 64
  %v222 = vpop.permute.xlu0 %221
  %vm224 = vcmask 64512
  %v225 = vsel %vm224, %v222, 0.0
  %226 = vadd.xlane.f32.xlu0 %v225
  %v227 = vpop.xlane.xlu0 %226
  %v228 = vrcp.pop %v227
  %v229 = vmul.f32 %v219, %v228
  %v230 = vlaneseq
  %v231 = vand.u32 %v230, 127
  %vm232 = vcmp.eq.f32.partialorder %v212, %v216
  %233 = vrot.lane.b32.xlu0 %v231, 64
  %v234 = vpop.permute.xlu0 %233
  %v235 = vsel %vm232, %v234, 8
  %v236 = vsel %vm213, %v235, 2147483647
  %v237 = vand.u32 %v236, 65535
  %v238 = vshra.s32 %v236, 16
  %v239 = vcvt.s32.f32 %v237
  %v240 = vcvt.s32.f32 %v238
  %241 = vmin.xlane.f32.xlu0 %v240
  %v242 = vpop.xlane.xlu0 %241
  %vm243 = vcmp.eq.f32.partialorder %v240, %v242
  %v244 = vsel %vm243, %v239, inf
  %245 = vmin.xlane.f32.xlu0 %v244
  %v246 = vpop.xlane.xlu0 %245
  %v247 = vcvt.f32.s32 %v246
  %v248 = vcvt.f32.s32 %v242
  %v249 = vshll.u32 %v248, 16
  %v250 = vadd.s32 %v249, %v247
  %vm251 = vcmp.eq.s32.totalorder %v231, %v250
  %v252 = vsel %vm251, 1, 0
  %v253 = vcvt.s32.f32 %v252
  %v254 = vld [vmem:[%s2 + $0x60] sm:$0xff]
  %v256 = vsel %vm224, %v253, 0
  %258 = vmatprep.subr.mxu0 0.0
  %259 = vmatpush1.msra.mxu0 %v254
  %260 = vmatprep.subr.mxu0 0.0
  %261 = vmatpush1.msra.mxu0 0.0
  %262 = vmatprep.subr.mxu0 0.0
  %263 = vmatpush1.msra.mxu0 0.0
  %264 = vmatprep.subr.mxu0 0.0
  %265 = vmatpush1.msra.mxu0 0.0
  %266 = vmatprep.subr.mxu0 0.0
  %267 = vmatpush1.msra.mxu0 0.0
  %268 = vmatprep.subr.mxu0 0.0
  %269 = vmatpush1.msra.mxu0 0.0
  %270 = vmatprep.subr.mxu0 0.0
  %271 = vmatpush1.msra.mxu0 0.0
  %272 = vmatprep.subr.mxu0 0.0
  %273 = vmatpush1.msra.mxu0 0.0
  %274 = vmatprep.subr.mxu0 0.0
  %275 = vmatpush1.msra.mxu0 0.0
  %276 = vmatprep.subr.mxu0 0.0
  %277 = vmatpush1.msra.mxu0 0.0
  %278 = vmatprep.subr.mxu0 0.0
  %279 = vmatpush1.msra.mxu0 0.0
  %280 = vmatprep.subr.mxu0 0.0
  %281 = vmatpush1.msra.mxu0 0.0
  %282 = vmatprep.subr.mxu0 0.0
  %283 = vmatpush1.msra.mxu0 0.0
  %284 = vmatprep.subr.mxu0 0.0
  %285 = vmatpush1.msra.mxu0 0.0
  %286 = vmatprep.subr.mxu0 0.0
  %287 = vmatpush1.msra.mxu0 0.0
  %288 = vmatprep.subr.mxu0 0.0
  %289 = vmatpush1.msra.mxu0 0.0
  %290 = vmatprep.subr.mxu0 0.0
  %291 = vmatpush1.msra.mxu0 0.0
  %292 = vmatprep.subr.mxu0 0.0
  %293 = vmatpush1.msra.mxu0 0.0
  %294 = vmatprep.subr.mxu0 0.0
  %295 = vmatpush1.msra.mxu0 0.0
  %296 = vmatprep.subr.mxu0 0.0
  %297 = vmatpush1.msra.mxu0 0.0
  %298 = vmatprep.subr.mxu0 0.0
  %299 = vmatpush1.msra.mxu0 0.0
  %300 = vmatprep.subr.mxu0 0.0
  %301 = vmatpush1.msra.mxu0 0.0
  %302 = vmatprep.subr.mxu0 0.0
  %303 = vmatpush1.msra.mxu0 0.0
  %304 = vmatprep.subr.mxu0 0.0
  %305 = vmatpush1.msra.mxu0 0.0
  %306 = vmatprep.subr.mxu0 0.0
  %307 = vmatpush1.msra.mxu0 0.0
  %308 = vmatprep.subr.mxu0 0.0
  %309 = vmatpush1.msra.mxu0 0.0
  %310 = vmatprep.subr.mxu0 0.0
  %311 = vmatpush1.msra.mxu0 0.0
  %312 = vmatprep.subr.mxu0 0.0
  %313 = vmatpush1.msra.mxu0 0.0
  %314 = vmatprep.subr.mxu0 0.0
  %315 = vmatpush1.msra.mxu0 0.0
  %316 = vmatprep.subr.mxu0 0.0
  %317 = vmatpush1.msra.mxu0 0.0
  %318 = vmatprep.subr.mxu0 0.0
  %319 = vmatpush1.msra.mxu0 0.0
  %320 = vmatprep.subr.mxu0 0.0
  %321 = vmatpush1.msra.mxu0 0.0
  %322 = vmatprep.mubr.f32.mxu0 0.0
  %323 = vmatmul.mubr.f32.gmra.mrb[0].mxu0 %v256
  %v324 = vpop.f32.mrb[0].mxu0
  %v325 = vadd.f32 0.0, %v324
  %v326 = vpop.f32.mrb[0].mxu0
  %327 = vdwg.mxu0
  %v328 = vadd.f32 %v19, %v325
  %v329 = vld [vmem:[%s2 + $0x68] sm:$0xff]
  %v330 = vld [vmem:[%s2 + $0x70] sm:$0xff]
  %v331 = vld [vmem:[%s2 + $0x78] sm:$0xff]
  %v332 = vld [vmem:[%s2 + $0x80] sm:$0xff]
  %v333 = vlaneseq
  %v334 = vshrl.u32 %v333, 7
  %v335 = vsub.s32 2, %v334
  %v336 = vrot.slane %v36, %v335
  %v338 = vsel %vm133, %v328, 0
  %340 = vmatprep.subr.mxu0 0.0
  %341 = vmatpush1.msra.mxu0 %v329
  %342 = vmatprep.subr.mxu0 0.0
  %343 = vmatpush1.msra.mxu0 %v330
  %344 = vmatprep.subr.mxu0 0.0
  %345 = vmatpush1.msra.mxu0 %v331
  %346 = vmatprep.subr.mxu0 0.0
  %347 = vmatpush1.msra.mxu0 %v332
  %348 = vmatprep.subr.mxu0 0.0
  %349 = vmatpush1.msra.mxu0 0.0
  %350 = vmatprep.subr.mxu0 0.0
  %351 = vmatpush1.msra.mxu0 0.0
  %352 = vmatprep.subr.mxu0 0.0
  %353 = vmatpush1.msra.mxu0 0.0
  %354 = vmatprep.subr.mxu0 0.0
  %355 = vmatpush1.msra.mxu0 0.0
  %356 = vmatprep.subr.mxu0 0.0
  %357 = vmatpush1.msra.mxu0 0.0
  %358 = vmatprep.subr.mxu0 0.0
  %359 = vmatpush1.msra.mxu0 0.0
  %360 = vmatprep.subr.mxu0 0.0
  %361 = vmatpush1.msra.mxu0 0.0
  %362 = vmatprep.subr.mxu0 0.0
  %363 = vmatpush1.msra.mxu0 0.0
  %364 = vmatprep.subr.mxu0 0.0
  %365 = vmatpush1.msra.mxu0 0.0
  %366 = vmatprep.subr.mxu0 0.0
  %367 = vmatpush1.msra.mxu0 0.0
  %368 = vmatprep.subr.mxu0 0.0
  %369 = vmatpush1.msra.mxu0 0.0
  %370 = vmatprep.subr.mxu0 0.0
  %371 = vmatpush1.msra.mxu0 0.0
  %372 = vmatprep.subr.mxu0 0.0
  %373 = vmatpush1.msra.mxu0 0.0
  %374 = vmatprep.subr.mxu0 0.0
  %375 = vmatpush1.msra.mxu0 0.0
  %376 = vmatprep.subr.mxu0 0.0
  %377 = vmatpush1.msra.mxu0 0.0
  %378 = vmatprep.subr.mxu0 0.0
  %379 = vmatpush1.msra.mxu0 0.0
  %380 = vmatprep.subr.mxu0 0.0
  %381 = vmatpush1.msra.mxu0 0.0
  %382 = vmatprep.subr.mxu0 0.0
  %383 = vmatpush1.msra.mxu0 0.0
  %384 = vmatprep.subr.mxu0 0.0
  %385 = vmatpush1.msra.mxu0 0.0
  %386 = vmatprep.subr.mxu0 0.0
  %387 = vmatpush1.msra.mxu0 0.0
  %388 = vmatprep.subr.mxu0 0.0
  %389 = vmatpush1.msra.mxu0 0.0
  %390 = vmatprep.subr.mxu0 0.0
  %391 = vmatpush1.msra.mxu0 0.0
  %392 = vmatprep.subr.mxu0 0.0
  %393 = vmatpush1.msra.mxu0 0.0
  %394 = vmatprep.subr.mxu0 0.0
  %395 = vmatpush1.msra.mxu0 0.0
  %396 = vmatprep.subr.mxu0 0.0
  %397 = vmatpush1.msra.mxu0 0.0
  %398 = vmatprep.subr.mxu0 0.0
  %399 = vmatpush1.msra.mxu0 0.0
  %400 = vmatprep.subr.mxu0 0.0
  %401 = vmatpush1.msra.mxu0 0.0
  %402 = vmatprep.subr.mxu0 0.0
  %403 = vmatpush1.msra.mxu0 0.0
  %404 = vmatprep.mubr.f32.mxu0 0.0
  %405 = vmatmul.mubr.f32.gmra.mrb[0].mxu0 %v338
  %v406 = vpop.f32.mrb[0].mxu0
  %v407 = vadd.f32 %v336, %v406
  %v408 = vpop.f32.mrb[0].mxu0
  %409 = vdwg.mxu0
  %v410 = vmax.f32 %v407, 0.0
  %v411 = vld [vmem:[%s2 + $0x88] sm:$0xff]
  %v412 = vld [vmem:[%s2 + $0x90] sm:$0xff]
  %v413 = vld [vmem:[%s2 + $0x98] sm:$0xff]
  %v414 = vld [vmem:[%s2 + $0xa0] sm:$0xff]
  %v415 = vlaneseq
  %v416 = vshrl.u32 %v415, 7
  %v417 = vsub.s32 3, %v416
  %v418 = vrot.slane %v36, %v417
  %v420 = vsel %vm133, %v410, 0
  %422 = vmatprep.subr.mxu0 0.0
  %423 = vmatpush1.msra.mxu0 %v411
  %424 = vmatprep.subr.mxu0 0.0
  %425 = vmatpush1.msra.mxu0 %v412
  %426 = vmatprep.subr.mxu0 0.0
  %427 = vmatpush1.msra.mxu0 %v413
  %428 = vmatprep.subr.mxu0 0.0
  %429 = vmatpush1.msra.mxu0 %v414
  %430 = vmatprep.subr.mxu0 0.0
  %431 = vmatpush1.msra.mxu0 0.0
  %432 = vmatprep.subr.mxu0 0.0
  %433 = vmatpush1.msra.mxu0 0.0
  %434 = vmatprep.subr.mxu0 0.0
  %435 = vmatpush1.msra.mxu0 0.0
  %436 = vmatprep.subr.mxu0 0.0
  %437 = vmatpush1.msra.mxu0 0.0
  %438 = vmatprep.subr.mxu0 0.0
  %439 = vmatpush1.msra.mxu0 0.0
  %440 = vmatprep.subr.mxu0 0.0
  %441 = vmatpush1.msra.mxu0 0.0
  %442 = vmatprep.subr.mxu0 0.0
  %443 = vmatpush1.msra.mxu0 0.0
  %444 = vmatprep.subr.mxu0 0.0
  %445 = vmatpush1.msra.mxu0 0.0
  %446 = vmatprep.subr.mxu0 0.0
  %447 = vmatpush1.msra.mxu0 0.0
  %448 = vmatprep.subr.mxu0 0.0
  %449 = vmatpush1.msra.mxu0 0.0
  %450 = vmatprep.subr.mxu0 0.0
  %451 = vmatpush1.msra.mxu0 0.0
  %452 = vmatprep.subr.mxu0 0.0
  %453 = vmatpush1.msra.mxu0 0.0
  %454 = vmatprep.subr.mxu0 0.0
  %455 = vmatpush1.msra.mxu0 0.0
  %456 = vmatprep.subr.mxu0 0.0
  %457 = vmatpush1.msra.mxu0 0.0
  %458 = vmatprep.subr.mxu0 0.0
  %459 = vmatpush1.msra.mxu0 0.0
  %460 = vmatprep.subr.mxu0 0.0
  %461 = vmatpush1.msra.mxu0 0.0
  %462 = vmatprep.subr.mxu0 0.0
  %463 = vmatpush1.msra.mxu0 0.0
  %464 = vmatprep.subr.mxu0 0.0
  %465 = vmatpush1.msra.mxu0 0.0
  %466 = vmatprep.subr.mxu0 0.0
  %467 = vmatpush1.msra.mxu0 0.0
  %468 = vmatprep.subr.mxu0 0.0
  %469 = vmatpush1.msra.mxu0 0.0
  %470 = vmatprep.subr.mxu0 0.0
  %471 = vmatpush1.msra.mxu0 0.0
  %472 = vmatprep.subr.mxu0 0.0
  %473 = vmatpush1.msra.mxu0 0.0
  %474 = vmatprep.subr.mxu0 0.0
  %475 = vmatpush1.msra.mxu0 0.0
  %476 = vmatprep.subr.mxu0 0.0
  %477 = vmatpush1.msra.mxu0 0.0
  %478 = vmatprep.subr.mxu0 0.0
  %479 = vmatpush1.msra.mxu0 0.0
  %480 = vmatprep.subr.mxu0 0.0
  %481 = vmatpush1.msra.mxu0 0.0
  %482 = vmatprep.subr.mxu0 0.0
  %483 = vmatpush1.msra.mxu0 0.0
  %484 = vmatprep.subr.mxu0 0.0
  %485 = vmatpush1.msra.mxu0 0.0
  %486 = vmatprep.mubr.f32.mxu0 0.0
  %487 = vmatmul.mubr.f32.gmra.mrb[0].mxu0 %v420
  %v488 = vpop.f32.mrb[0].mxu0
  %v489 = vadd.f32 %v418, %v488
  %v490 = vpop.f32.mrb[0].mxu0
  %491 = vdwg.mxu0
  %v493 = vcombine.high %v489, %v489
  %v495 = vunpack.c.l.s4 1966171168
  %v496 = vunpack.c.0.s8 %v495
  %v497 = vlaneseq
  %v498 = vshrl.u32 %v497, 7
  %v499 = vsub.s32 %v496, %v498
  %v500 = vrot.slane %v489, %v499
  %v502 = vunpack.c.l.s4 1966171168
  %v503 = vunpack.c.0.s8 %v502
  %v504 = vlaneseq
  %v505 = vshrl.u32 %v504, 7
  %v506 = vsub.s32 %v503, %v505
  %v507 = vrot.slane %v493, %v506
  %v508 = vcombine.high %v500, %v500
  %v509 = vcombine.high %v507, %v507
  %v511 = vunpack.c.l.s4 1966171168
  %v512 = vunpack.c.0.s8 %v511
  %v513 = vlaneseq
  %v514 = vshrl.u32 %v513, 7
  %v515 = vsub.s32 %v512, %v514
  %v516 = vrot.slane %v500, %v515
  %v518 = vunpack.c.l.s4 1966171168
  %v519 = vunpack.c.0.s8 %v518
  %v520 = vlaneseq
  %v521 = vshrl.u32 %v520, 7
  %v522 = vsub.s32 %v519, %v521
  %v523 = vrot.slane %v507, %v522
  %v525 = vunpack.c.l.s4 1966171168
  %v526 = vunpack.c.0.s8 %v525
  %v527 = vlaneseq
  %v528 = vshrl.u32 %v527, 7
  %v529 = vsub.s32 %v526, %v528
  %v530 = vrot.slane %v508, %v529
  %v532 = vunpack.c.l.s4 1966171168
  %v533 = vunpack.c.0.s8 %v532
  %v534 = vlaneseq
  %v535 = vshrl.u32 %v534, 7
  %v536 = vsub.s32 %v533, %v535
  %v537 = vrot.slane %v509, %v536
  %v538 = vcombine.high %v516, %v516
  %v539 = vcombine.high %v523, %v523
  %v540 = vcombine.high %v530, %v530
  %v541 = vcombine.high %v537, %v537
  %v542 = vlaneseq
  %v543 = vshrl.u32 %v542, 7
  %v544 = vsub.s32 0, %v543
  %v545 = vrot.slane %v516, %v544
  %v546 = vlaneseq
  %v547 = vshrl.u32 %v546, 7
  %v548 = vsub.s32 0, %v547
  %v549 = vrot.slane %v530, %v548
  %v550 = vlaneseq
  %v551 = vshrl.u32 %v550, 7
  %v552 = vsub.s32 0, %v551
  %v553 = vrot.slane %v538, %v552
  %v554 = vlaneseq
  %v555 = vshrl.u32 %v554, 7
  %v556 = vsub.s32 0, %v555
  %v557 = vrot.slane %v540, %v556
  %v558 = vlaneseq
  %v559 = vshrl.u32 %v558, 7
  %v560 = vsub.s32 0, %v559
  %v561 = vrot.slane %v523, %v560
  %v562 = vlaneseq
  %v563 = vshrl.u32 %v562, 7
  %v564 = vsub.s32 0, %v563
  %v565 = vrot.slane %v537, %v564
  %v566 = vlaneseq
  %v567 = vshrl.u32 %v566, 7
  %v568 = vsub.s32 0, %v567
  %v569 = vrot.slane %v539, %v568
  %v570 = vlaneseq
  %v571 = vshrl.u32 %v570, 7
  %v572 = vsub.s32 0, %v571
  %v573 = vrot.slane %v541, %v572
  %v582 = vmul.f32 %v545, %v20
  %v583 = vmul.f32 %v549, %v22
  %v584 = vmul.f32 %v553, %v24
  %v585 = vmul.f32 %v557, %v26
  %v586 = vmul.f32 %v561, %v28
  %v587 = vmul.f32 %v565, %v30
  %v588 = vmul.f32 %v569, %v32
  %v589 = vmul.f32 %v573, %v34
  %v590 = vsel %vm133, %v582, 0.0
  %591 = vadd.xlane.f32.xlu0 %v590
  %v592 = vpop.xlane.xlu0 %591
  %v593 = vsel %vm133, %v583, 0.0
  %594 = vadd.xlane.f32.xlu0 %v593
  %v595 = vpop.xlane.xlu0 %594
  %v596 = vsel %vm133, %v584, 0.0
  %597 = vadd.xlane.f32.xlu0 %v596
  %v598 = vpop.xlane.xlu0 %597
  %v599 = vsel %vm133, %v585, 0.0
  %600 = vadd.xlane.f32.xlu0 %v599
  %v601 = vpop.xlane.xlu0 %600
  %v602 = vsel %vm133, %v586, 0.0
  %603 = vadd.xlane.f32.xlu0 %v602
  %v604 = vpop.xlane.xlu0 %603
  %v605 = vsel %vm133, %v587, 0.0
  %606 = vadd.xlane.f32.xlu0 %v605
  %v607 = vpop.xlane.xlu0 %606
  %v608 = vsel %vm133, %v588, 0.0
  %609 = vadd.xlane.f32.xlu0 %v608
  %v610 = vpop.xlane.xlu0 %609
  %v611 = vsel %vm133, %v589, 0.0
  %612 = vadd.xlane.f32.xlu0 %v611
  %v613 = vpop.xlane.xlu0 %612
  %v622 = vadd.s32 %v231, 4294967224
  %v623 = vlaneseq
  %v624 = vshrl.u32 %v623, 7
  %v625 = vsub.s32 %v622, %v624
  %v626 = vrot.slane %v592, %v625
  %v627 = vlaneseq
  %v628 = vshrl.u32 %v627, 7
  %v629 = vsub.s32 %v622, %v628
  %v630 = vrot.slane %v595, %v629
  %v631 = vlaneseq
  %v632 = vshrl.u32 %v631, 7
  %v633 = vsub.s32 %v622, %v632
  %v634 = vrot.slane %v598, %v633
  %v635 = vlaneseq
  %v636 = vshrl.u32 %v635, 7
  %v637 = vsub.s32 %v622, %v636
  %v638 = vrot.slane %v601, %v637
  %v639 = vlaneseq
  %v640 = vshrl.u32 %v639, 7
  %v641 = vsub.s32 %v622, %v640
  %v642 = vrot.slane %v604, %v641
  %v643 = vlaneseq
  %v644 = vshrl.u32 %v643, 7
  %v645 = vsub.s32 %v622, %v644
  %v646 = vrot.slane %v607, %v645
  %v647 = vlaneseq
  %v648 = vshrl.u32 %v647, 7
  %v649 = vsub.s32 %v622, %v648
  %v650 = vrot.slane %v610, %v649
  %v651 = vlaneseq
  %v652 = vshrl.u32 %v651, 7
  %v653 = vsub.s32 %v622, %v652
  %v654 = vrot.slane %v613, %v653
  %vm655 = vcmask 1041409
  %v656 = vsel %vm655, %v630, %v626
  %vm657 = vcmask 1042434
  %v658 = vsel %vm657, %v634, %v656
  %vm659 = vcmask 1043459
  %v660 = vsel %vm659, %v638, %v658
  %vm661 = vcmask 1044484
  %v662 = vsel %vm661, %v642, %v660
  %vm663 = vcmask 1045509
  %v664 = vsel %vm663, %v646, %v662
  %vm665 = vcmask 1046534
  %v666 = vsel %vm665, %v650, %v664
  %vm667 = vcmask 1047559
  %v668 = vsel %vm667, %v654, %v666
  %v670 = vsel %vm207, %v668, -1e+30
  %vm671 = vcmask 654912
  %v672 = vsel %vm671, %v670, -inf
  %673 = vmax.xlane.f32.xlu0 %v672
  %v674 = vpop.xlane.xlu0 %673
  %v675 = vsub.f32 %v670, %v674
  %v676 = vmul.f32 %v675, 1.442695
  %v677 = vpow.pop %v676
  %679 = vrot.lane.b32.xlu0 %v677, 56
  %v680 = vpop.permute.xlu0 %679
  %v682 = vsel %vm224, %v680, 0.0
  %683 = vadd.xlane.f32.xlu0 %v682
  %v684 = vpop.xlane.xlu0 %683
  %v685 = vrcp.pop %v684
  %v686 = vmul.f32 %v677, %v685
  %vm687 = vcmp.eq.f32.partialorder %v670, %v674
  %688 = vrot.lane.b32.xlu0 %v231, 72
  %v689 = vpop.permute.xlu0 %688
  %v690 = vsel %vm687, %v689, 8
  %v691 = vsel %vm671, %v690, 2147483647
  %v692 = vand.u32 %v691, 65535
  %v693 = vshra.s32 %v691, 16
  %v694 = vcvt.s32.f32 %v692
  %v695 = vcvt.s32.f32 %v693
  %696 = vmin.xlane.f32.xlu0 %v695
  %v697 = vpop.xlane.xlu0 %696
  %vm698 = vcmp.eq.f32.partialorder %v695, %v697
  %v699 = vsel %vm698, %v694, inf
  %700 = vmin.xlane.f32.xlu0 %v699
  %v701 = vpop.xlane.xlu0 %700
  %v702 = vcvt.f32.s32 %v701
  %v703 = vcvt.f32.s32 %v697
  %v704 = vshll.u32 %v703, 16
  %v705 = vadd.s32 %v704, %v702
  %vm706 = vcmp.eq.s32.totalorder %v231, %v705
  %v707 = vsel %vm706, 1, 0
  %v708 = vcvt.s32.f32 %v707
  %v709 = vlaneseq
  %v710 = vshrl.u32 %v709, 7
  %v711 = vsub.s32 0, %v710
  %v712 = vrot.slane %v708, %v711
  %714 = vbcast.lane.b32.xlu0 %v712, 256
  %v715 = vpop.permute.xlu0 %714
  %v716 = vlaneseq
  %v717 = vshrl.u32 %v716, 7
  %v718 = vsub.s32 1, %v717
  %v719 = vrot.slane %v708, %v718
  %721 = vbcast.lane.b32.xlu0 %v719, 256
  %v722 = vpop.permute.xlu0 %721
  %v723 = vlaneseq
  %v724 = vshrl.u32 %v723, 7
  %v725 = vsub.s32 2, %v724
  %v726 = vrot.slane %v708, %v725
  %728 = vbcast.lane.b32.xlu0 %v726, 256
  %v729 = vpop.permute.xlu0 %728
  %v730 = vlaneseq
  %v731 = vshrl.u32 %v730, 7
  %v732 = vsub.s32 3, %v731
  %v733 = vrot.slane %v708, %v732
  %735 = vbcast.lane.b32.xlu0 %v733, 256
  %v736 = vpop.permute.xlu0 %735
  %v737 = vlaneseq
  %v738 = vshrl.u32 %v737, 7
  %v739 = vsub.s32 4, %v738
  %v740 = vrot.slane %v708, %v739
  %742 = vbcast.lane.b32.xlu0 %v740, 256
  %v743 = vpop.permute.xlu0 %742
  %v744 = vlaneseq
  %v745 = vshrl.u32 %v744, 7
  %v746 = vsub.s32 5, %v745
  %v747 = vrot.slane %v708, %v746
  %749 = vbcast.lane.b32.xlu0 %v747, 256
  %v750 = vpop.permute.xlu0 %749
  %v751 = vlaneseq
  %v752 = vshrl.u32 %v751, 7
  %v753 = vsub.s32 6, %v752
  %v754 = vrot.slane %v708, %v753
  %756 = vbcast.lane.b32.xlu0 %v754, 256
  %v757 = vpop.permute.xlu0 %756
  %v758 = vlaneseq
  %v759 = vshrl.u32 %v758, 7
  %v760 = vsub.s32 7, %v759
  %v761 = vrot.slane %v708, %v760
  %763 = vbcast.lane.b32.xlu0 %v761, 256
  %v764 = vpop.permute.xlu0 %763
  %v765 = vmul.f32 %v715, %v20
  %v766 = vmul.f32 %v722, %v22
  %v767 = vmul.f32 %v729, %v24
  %v768 = vmul.f32 %v736, %v26
  %v769 = vmul.f32 %v743, %v28
  %v770 = vmul.f32 %v750, %v30
  %v771 = vmul.f32 %v757, %v32
  %v772 = vmul.f32 %v764, %v34
  %v773 = vsel %vm133, %v765, 0.0
  %v774 = vrot.slane %v773, 4
  %v775 = vadd.f32 %v773, %v774
  %v776 = vrot.slane %v775, 2
  %v777 = vadd.f32 %v775, %v776
  %v778 = vrot.slane %v777, 1
  %v779 = vadd.f32 %v777, %v778
  %v780 = vsel %vm133, %v766, 0.0
  %v781 = vrot.slane %v780, 4
  %v782 = vadd.f32 %v780, %v781
  %v783 = vrot.slane %v782, 2
  %v784 = vadd.f32 %v782, %v783
  %v785 = vrot.slane %v784, 1
  %v786 = vadd.f32 %v784, %v785
  %v787 = vsel %vm133, %v767, 0.0
  %v788 = vrot.slane %v787, 4
  %v789 = vadd.f32 %v787, %v788
  %v790 = vrot.slane %v789, 2
  %v791 = vadd.f32 %v789, %v790
  %v792 = vrot.slane %v791, 1
  %v793 = vadd.f32 %v791, %v792
  %v794 = vsel %vm133, %v768, 0.0
  %v795 = vrot.slane %v794, 4
  %v796 = vadd.f32 %v794, %v795
  %v797 = vrot.slane %v796, 2
  %v798 = vadd.f32 %v796, %v797
  %v799 = vrot.slane %v798, 1
  %v800 = vadd.f32 %v798, %v799
  %v801 = vsel %vm133, %v769, 0.0
  %v802 = vrot.slane %v801, 4
  %v803 = vadd.f32 %v801, %v802
  %v804 = vrot.slane %v803, 2
  %v805 = vadd.f32 %v803, %v804
  %v806 = vrot.slane %v805, 1
  %v807 = vadd.f32 %v805, %v806
  %v808 = vsel %vm133, %v770, 0.0
  %v809 = vrot.slane %v808, 4
  %v810 = vadd.f32 %v808, %v809
  %v811 = vrot.slane %v810, 2
  %v812 = vadd.f32 %v810, %v811
  %v813 = vrot.slane %v812, 1
  %v814 = vadd.f32 %v812, %v813
  %v815 = vsel %vm133, %v771, 0.0
  %v816 = vrot.slane %v815, 4
  %v817 = vadd.f32 %v815, %v816
  %v818 = vrot.slane %v817, 2
  %v819 = vadd.f32 %v817, %v818
  %v820 = vrot.slane %v819, 1
  %v821 = vadd.f32 %v819, %v820
  %v822 = vsel %vm133, %v772, 0.0
  %v823 = vrot.slane %v822, 4
  %v824 = vadd.f32 %v822, %v823
  %v825 = vrot.slane %v824, 2
  %v826 = vadd.f32 %v824, %v825
  %v827 = vrot.slane %v826, 1
  %v828 = vadd.f32 %v826, %v827
  %vm829 = vcmp.eq.s32.totalorder %v250, 0
  %v830 = vsel %vm829, 1, 0
  %v831 = vcvt.s32.f32 %v830
  %v832 = vld [vmem:[%s2 + $0xa8] sm:$0xff]
  %v833 = vld [vmem:[%s2 + $0xb0] sm:$0xff]
  %v834 = vld [vmem:[%s2 + $0xb8] sm:$0xff]
  %v835 = vld [vmem:[%s2 + $0xc0] sm:$0xff]
  %v836 = vlaneseq
  %v837 = vshrl.u32 %v836, 7
  %v838 = vsub.s32 4, %v837
  %v839 = vrot.slane %v36, %v838
  %v848 = vsel %vm655, %v786, %v779
  %v849 = vsel %vm657, %v793, %v848
  %v850 = vsel %vm659, %v800, %v849
  %v851 = vsel %vm661, %v807, %v850
  %v852 = vsel %vm663, %v814, %v851
  %v853 = vsel %vm665, %v821, %v852
  %v854 = vsel %vm667, %v828, %v853
  %v855 = vsel %vm133, %v854, 0
  %857 = vmatprep.subr.mxu0 0.0
  %858 = vmatpush1.msra.mxu0 %v832
  %859 = vmatprep.subr.mxu0 0.0
  %860 = vmatpush1.msra.mxu0 %v833
  %861 = vmatprep.subr.mxu0 0.0
  %862 = vmatpush1.msra.mxu0 %v834
  %863 = vmatprep.subr.mxu0 0.0
  %864 = vmatpush1.msra.mxu0 %v835
  %865 = vmatprep.subr.mxu0 0.0
  %866 = vmatpush1.msra.mxu0 0.0
  %867 = vmatprep.subr.mxu0 0.0
  %868 = vmatpush1.msra.mxu0 0.0
  %869 = vmatprep.subr.mxu0 0.0
  %870 = vmatpush1.msra.mxu0 0.0
  %871 = vmatprep.subr.mxu0 0.0
  %872 = vmatpush1.msra.mxu0 0.0
  %873 = vmatprep.subr.mxu0 0.0
  %874 = vmatpush1.msra.mxu0 0.0
  %875 = vmatprep.subr.mxu0 0.0
  %876 = vmatpush1.msra.mxu0 0.0
  %877 = vmatprep.subr.mxu0 0.0
  %878 = vmatpush1.msra.mxu0 0.0
  %879 = vmatprep.subr.mxu0 0.0
  %880 = vmatpush1.msra.mxu0 0.0
  %881 = vmatprep.subr.mxu0 0.0
  %882 = vmatpush1.msra.mxu0 0.0
  %883 = vmatprep.subr.mxu0 0.0
  %884 = vmatpush1.msra.mxu0 0.0
  %885 = vmatprep.subr.mxu0 0.0
  %886 = vmatpush1.msra.mxu0 0.0
  %887 = vmatprep.subr.mxu0 0.0
  %888 = vmatpush1.msra.mxu0 0.0
  %889 = vmatprep.subr.mxu0 0.0
  %890 = vmatpush1.msra.mxu0 0.0
  %891 = vmatprep.subr.mxu0 0.0
  %892 = vmatpush1.msra.mxu0 0.0
  %893 = vmatprep.subr.mxu0 0.0
  %894 = vmatpush1.msra.mxu0 0.0
  %895 = vmatprep.subr.mxu0 0.0
  %896 = vmatpush1.msra.mxu0 0.0
  %897 = vmatprep.subr.mxu0 0.0
  %898 = vmatpush1.msra.mxu0 0.0
  %899 = vmatprep.subr.mxu0 0.0
  %900 = vmatpush1.msra.mxu0 0.0
  %901 = vmatprep.subr.mxu0 0.0
  %902 = vmatpush1.msra.mxu0 0.0
  %903 = vmatprep.subr.mxu0 0.0
  %904 = vmatpush1.msra.mxu0 0.0
  %905 = vmatprep.subr.mxu0 0.0
  %906 = vmatpush1.msra.mxu0 0.0
  %907 = vmatprep.subr.mxu0 0.0
  %908 = vmatpush1.msra.mxu0 0.0
  %909 = vmatprep.subr.mxu0 0.0
  %910 = vmatpush1.msra.mxu0 0.0
  %911 = vmatprep.subr.mxu0 0.0
  %912 = vmatpush1.msra.mxu0 0.0
  %913 = vmatprep.subr.mxu0 0.0
  %914 = vmatpush1.msra.mxu0 0.0
  %915 = vmatprep.subr.mxu0 0.0
  %916 = vmatpush1.msra.mxu0 0.0
  %917 = vmatprep.subr.mxu0 0.0
  %918 = vmatpush1.msra.mxu0 0.0
  %919 = vmatprep.subr.mxu0 0.0
  %920 = vmatpush1.msra.mxu0 0.0
  %921 = vmatprep.mubr.f32.mxu0 0.0
  %922 = vmatmul.mubr.f32.gmra.mrb[0].mxu0 %v855
  %v923 = vpop.f32.mrb[0].mxu0
  %v924 = vadd.f32 %v839, %v923
  %v925 = vpop.f32.mrb[0].mxu0
  %926 = vdwg.mxu0
  %v927 = vmul.f32 %v831, %v924
  %v928 = vadd.f32 %v328, %v927
  %v929 = vld [vmem:[%s2 + $0xc8] sm:$0xff]
  %v930 = vld [vmem:[%s2 + $0xd0] sm:$0xff]
  %v931 = vld [vmem:[%s2 + $0xd8] sm:$0xff]
  %v932 = vld [vmem:[%s2 + $0xe0] sm:$0xff]
  %v933 = vlaneseq
  %v934 = vshrl.u32 %v933, 7
  %v935 = vsub.s32 5, %v934
  %v936 = vrot.slane %v36, %v935
  %v938 = vsel %vm133, %v928, 0
  %940 = vmatprep.subr.mxu0 0.0
  %941 = vmatpush1.msra.mxu0 %v929
  %942 = vmatprep.subr.mxu0 0.0
  %943 = vmatpush1.msra.mxu0 %v930
  %944 = vmatprep.subr.mxu0 0.0
  %945 = vmatpush1.msra.mxu0 %v931
  %946 = vmatprep.subr.mxu0 0.0
  %947 = vmatpush1.msra.mxu0 %v932
  %948 = vmatprep.subr.mxu0 0.0
  %949 = vmatpush1.msra.mxu0 0.0
  %950 = vmatprep.subr.mxu0 0.0
  %951 = vmatpush1.msra.mxu0 0.0
  %952 = vmatprep.subr.mxu0 0.0
  %953 = vmatpush1.msra.mxu0 0.0
  %954 = vmatprep.subr.mxu0 0.0
  %955 = vmatpush1.msra.mxu0 0.0
  %956 = vmatprep.subr.mxu0 0.0
  %957 = vmatpush1.msra.mxu0 0.0
  %958 = vmatprep.subr.mxu0 0.0
  %959 = vmatpush1.msra.mxu0 0.0
  %960 = vmatprep.subr.mxu0 0.0
  %961 = vmatpush1.msra.mxu0 0.0
  %962 = vmatprep.subr.mxu0 0.0
  %963 = vmatpush1.msra.mxu0 0.0
  %964 = vmatprep.subr.mxu0 0.0
  %965 = vmatpush1.msra.mxu0 0.0
  %966 = vmatprep.subr.mxu0 0.0
  %967 = vmatpush1.msra.mxu0 0.0
  %968 = vmatprep.subr.mxu0 0.0
  %969 = vmatpush1.msra.mxu0 0.0
  %970 = vmatprep.subr.mxu0 0.0
  %971 = vmatpush1.msra.mxu0 0.0
  %972 = vmatprep.subr.mxu0 0.0
  %973 = vmatpush1.msra.mxu0 0.0
  %974 = vmatprep.subr.mxu0 0.0
  %975 = vmatpush1.msra.mxu0 0.0
  %976 = vmatprep.subr.mxu0 0.0
  %977 = vmatpush1.msra.mxu0 0.0
  %978 = vmatprep.subr.mxu0 0.0
  %979 = vmatpush1.msra.mxu0 0.0
  %980 = vmatprep.subr.mxu0 0.0
  %981 = vmatpush1.msra.mxu0 0.0
  %982 = vmatprep.subr.mxu0 0.0
  %983 = vmatpush1.msra.mxu0 0.0
  %984 = vmatprep.subr.mxu0 0.0
  %985 = vmatpush1.msra.mxu0 0.0
  %986 = vmatprep.subr.mxu0 0.0
  %987 = vmatpush1.msra.mxu0 0.0
  %988 = vmatprep.subr.mxu0 0.0
  %989 = vmatpush1.msra.mxu0 0.0
  %990 = vmatprep.subr.mxu0 0.0
  %991 = vmatpush1.msra.mxu0 0.0
  %992 = vmatprep.subr.mxu0 0.0
  %993 = vmatpush1.msra.mxu0 0.0
  %994 = vmatprep.subr.mxu0 0.0
  %995 = vmatpush1.msra.mxu0 0.0
  %996 = vmatprep.subr.mxu0 0.0
  %997 = vmatpush1.msra.mxu0 0.0
  %998 = vmatprep.subr.mxu0 0.0
  %999 = vmatpush1.msra.mxu0 0.0
  %1000 = vmatprep.subr.mxu0 0.0
  %1001 = vmatpush1.msra.mxu0 0.0
  %1002 = vmatprep.subr.mxu0 0.0
  %1003 = vmatpush1.msra.mxu0 0.0
  %1004 = vmatprep.mubr.f32.mxu0 0.0
  %1005 = vmatmul.mubr.f32.gmra.mrb[0].mxu0 %v938
  %v1006 = vpop.f32.mrb[0].mxu0
  %v1007 = vadd.f32 %v936, %v1006
  %v1008 = vpop.f32.mrb[0].mxu0
  %1009 = vdwg.mxu0
  %v1010 = vmax.f32 %v1007, 0.0
  %v1011 = vld [vmem:[%s2 + $0xe8] sm:$0xff]
  %v1012 = vld [vmem:[%s2 + $0xf0] sm:$0xff]
  %v1013 = vld [vmem:[%s2 + $0xf8] sm:$0xff]
  %v1014 = vld [vmem:[%s2 + $0x100] sm:$0xff]
  %v1015 = vlaneseq
  %v1016 = vshrl.u32 %v1015, 7
  %v1017 = vsub.s32 6, %v1016
  %v1018 = vrot.slane %v36, %v1017
  %v1020 = vsel %vm133, %v1010, 0
  %1022 = vmatprep.subr.mxu0 0.0
  %1023 = vmatpush1.msra.mxu0 %v1011
  %1024 = vmatprep.subr.mxu0 0.0
  %1025 = vmatpush1.msra.mxu0 %v1012
  %1026 = vmatprep.subr.mxu0 0.0
  %1027 = vmatpush1.msra.mxu0 %v1013
  %1028 = vmatprep.subr.mxu0 0.0
  %1029 = vmatpush1.msra.mxu0 %v1014
  %1030 = vmatprep.subr.mxu0 0.0
  %1031 = vmatpush1.msra.mxu0 0.0
  %1032 = vmatprep.subr.mxu0 0.0
  %1033 = vmatpush1.msra.mxu0 0.0
  %1034 = vmatprep.subr.mxu0 0.0
  %1035 = vmatpush1.msra.mxu0 0.0
  %1036 = vmatprep.subr.mxu0 0.0
  %1037 = vmatpush1.msra.mxu0 0.0
  %1038 = vmatprep.subr.mxu0 0.0
  %1039 = vmatpush1.msra.mxu0 0.0
  %1040 = vmatprep.subr.mxu0 0.0
  %1041 = vmatpush1.msra.mxu0 0.0
  %1042 = vmatprep.subr.mxu0 0.0
  %1043 = vmatpush1.msra.mxu0 0.0
  %1044 = vmatprep.subr.mxu0 0.0
  %1045 = vmatpush1.msra.mxu0 0.0
  %1046 = vmatprep.subr.mxu0 0.0
  %1047 = vmatpush1.msra.mxu0 0.0
  %1048 = vmatprep.subr.mxu0 0.0
  %1049 = vmatpush1.msra.mxu0 0.0
  %1050 = vmatprep.subr.mxu0 0.0
  %1051 = vmatpush1.msra.mxu0 0.0
  %1052 = vmatprep.subr.mxu0 0.0
  %1053 = vmatpush1.msra.mxu0 0.0
  %1054 = vmatprep.subr.mxu0 0.0
  %1055 = vmatpush1.msra.mxu0 0.0
  %1056 = vmatprep.subr.mxu0 0.0
  %1057 = vmatpush1.msra.mxu0 0.0
  %1058 = vmatprep.subr.mxu0 0.0
  %1059 = vmatpush1.msra.mxu0 0.0
  %1060 = vmatprep.subr.mxu0 0.0
  %1061 = vmatpush1.msra.mxu0 0.0
  %1062 = vmatprep.subr.mxu0 0.0
  %1063 = vmatpush1.msra.mxu0 0.0
  %1064 = vmatprep.subr.mxu0 0.0
  %1065 = vmatpush1.msra.mxu0 0.0
  %1066 = vmatprep.subr.mxu0 0.0
  %1067 = vmatpush1.msra.mxu0 0.0
  %1068 = vmatprep.subr.mxu0 0.0
  %1069 = vmatpush1.msra.mxu0 0.0
  %1070 = vmatprep.subr.mxu0 0.0
  %1071 = vmatpush1.msra.mxu0 0.0
  %1072 = vmatprep.subr.mxu0 0.0
  %1073 = vmatpush1.msra.mxu0 0.0
  %1074 = vmatprep.subr.mxu0 0.0
  %1075 = vmatpush1.msra.mxu0 0.0
  %1076 = vmatprep.subr.mxu0 0.0
  %1077 = vmatpush1.msra.mxu0 0.0
  %1078 = vmatprep.subr.mxu0 0.0
  %1079 = vmatpush1.msra.mxu0 0.0
  %1080 = vmatprep.subr.mxu0 0.0
  %1081 = vmatpush1.msra.mxu0 0.0
  %1082 = vmatprep.subr.mxu0 0.0
  %1083 = vmatpush1.msra.mxu0 0.0
  %1084 = vmatprep.subr.mxu0 0.0
  %1085 = vmatpush1.msra.mxu0 0.0
  %1086 = vmatprep.mubr.f32.mxu0 0.0
  %1087 = vmatmul.mubr.f32.gmra.mrb[0].mxu0 %v1020
  %v1088 = vpop.f32.mrb[0].mxu0
  %v1089 = vadd.f32 %v1018, %v1088
  %v1090 = vpop.f32.mrb[0].mxu0
  %1091 = vdwg.mxu0
  %v1093 = vcombine.high %v1089, %v1089
  %v1095 = vunpack.c.l.s4 1966171168
  %v1096 = vunpack.c.0.s8 %v1095
  %v1097 = vlaneseq
  %v1098 = vshrl.u32 %v1097, 7
  %v1099 = vsub.s32 %v1096, %v1098
  %v1100 = vrot.slane %v1089, %v1099
  %v1102 = vunpack.c.l.s4 1966171168
  %v1103 = vunpack.c.0.s8 %v1102
  %v1104 = vlaneseq
  %v1105 = vshrl.u32 %v1104, 7
  %v1106 = vsub.s32 %v1103, %v1105
  %v1107 = vrot.slane %v1093, %v1106
  %v1108 = vcombine.high %v1100, %v1100
  %v1109 = vcombine.high %v1107, %v1107
  %v1111 = vunpack.c.l.s4 1966171168
  %v1112 = vunpack.c.0.s8 %v1111
  %v1113 = vlaneseq
  %v1114 = vshrl.u32 %v1113, 7
  %v1115 = vsub.s32 %v1112, %v1114
  %v1116 = vrot.slane %v1100, %v1115
  %v1118 = vunpack.c.l.s4 1966171168
  %v1119 = vunpack.c.0.s8 %v1118
  %v1120 = vlaneseq
  %v1121 = vshrl.u32 %v1120, 7
  %v1122 = vsub.s32 %v1119, %v1121
  %v1123 = vrot.slane %v1107, %v1122
  %v1125 = vunpack.c.l.s4 1966171168
  %v1126 = vunpack.c.0.s8 %v1125
  %v1127 = vlaneseq
  %v1128 = vshrl.u32 %v1127, 7
  %v1129 = vsub.s32 %v1126, %v1128
  %v1130 = vrot.slane %v1108, %v1129
  %v1132 = vunpack.c.l.s4 1966171168
  %v1133 = vunpack.c.0.s8 %v1132
  %v1134 = vlaneseq
  %v1135 = vshrl.u32 %v1134, 7
  %v1136 = vsub.s32 %v1133, %v1135
  %v1137 = vrot.slane %v1109, %v1136
  %v1138 = vcombine.high %v1116, %v1116
  %v1139 = vcombine.high %v1123, %v1123
  %v1140 = vcombine.high %v1130, %v1130
  %v1141 = vcombine.high %v1137, %v1137
  %v1142 = vlaneseq
  %v1143 = vshrl.u32 %v1142, 7
  %v1144 = vsub.s32 0, %v1143
  %v1145 = vrot.slane %v1116, %v1144
  %v1146 = vlaneseq
  %v1147 = vshrl.u32 %v1146, 7
  %v1148 = vsub.s32 0, %v1147
  %v1149 = vrot.slane %v1130, %v1148
  %v1150 = vlaneseq
  %v1151 = vshrl.u32 %v1150, 7
  %v1152 = vsub.s32 0, %v1151
  %v1153 = vrot.slane %v1138, %v1152
  %v1154 = vlaneseq
  %v1155 = vshrl.u32 %v1154, 7
  %v1156 = vsub.s32 0, %v1155
  %v1157 = vrot.slane %v1140, %v1156
  %v1158 = vlaneseq
  %v1159 = vshrl.u32 %v1158, 7
  %v1160 = vsub.s32 0, %v1159
  %v1161 = vrot.slane %v1123, %v1160
  %v1162 = vlaneseq
  %v1163 = vshrl.u32 %v1162, 7
  %v1164 = vsub.s32 0, %v1163
  %v1165 = vrot.slane %v1137, %v1164
  %v1166 = vlaneseq
  %v1167 = vshrl.u32 %v1166, 7
  %v1168 = vsub.s32 0, %v1167
  %v1169 = vrot.slane %v1139, %v1168
  %v1170 = vlaneseq
  %v1171 = vshrl.u32 %v1170, 7
  %v1172 = vsub.s32 0, %v1171
  %v1173 = vrot.slane %v1141, %v1172
  %v1182 = vmul.f32 %v1145, %v21
  %v1183 = vmul.f32 %v1149, %v23
  %v1184 = vmul.f32 %v1153, %v25
  %v1185 = vmul.f32 %v1157, %v27
  %v1186 = vmul.f32 %v1161, %v29
  %v1187 = vmul.f32 %v1165, %v31
  %v1188 = vmul.f32 %v1169, %v33
  %v1189 = vmul.f32 %v1173, %v35
  %v1190 = vsel %vm133, %v1182, 0.0
  %1191 = vadd.xlane.f32.xlu0 %v1190
  %v1192 = vpop.xlane.xlu0 %1191
  %v1193 = vsel %vm133, %v1183, 0.0
  %1194 = vadd.xlane.f32.xlu0 %v1193
  %v1195 = vpop.xlane.xlu0 %1194
  %v1196 = vsel %vm133, %v1184, 0.0
  %1197 = vadd.xlane.f32.xlu0 %v1196
  %v1198 = vpop.xlane.xlu0 %1197
  %v1199 = vsel %vm133, %v1185, 0.0
  %1200 = vadd.xlane.f32.xlu0 %v1199
  %v1201 = vpop.xlane.xlu0 %1200
  %v1202 = vsel %vm133, %v1186, 0.0
  %1203 = vadd.xlane.f32.xlu0 %v1202
  %v1204 = vpop.xlane.xlu0 %1203
  %v1205 = vsel %vm133, %v1187, 0.0
  %1206 = vadd.xlane.f32.xlu0 %v1205
  %v1207 = vpop.xlane.xlu0 %1206
  %v1208 = vsel %vm133, %v1188, 0.0
  %1209 = vadd.xlane.f32.xlu0 %v1208
  %v1210 = vpop.xlane.xlu0 %1209
  %v1211 = vsel %vm133, %v1189, 0.0
  %1212 = vadd.xlane.f32.xlu0 %v1211
  %v1213 = vpop.xlane.xlu0 %1212
  %v1222 = vadd.s32 %v231, 4294967216
  %v1223 = vlaneseq
  %v1224 = vshrl.u32 %v1223, 7
  %v1225 = vsub.s32 %v1222, %v1224
  %v1226 = vrot.slane %v1192, %v1225
  %v1227 = vlaneseq
  %v1228 = vshrl.u32 %v1227, 7
  %v1229 = vsub.s32 %v1222, %v1228
  %v1230 = vrot.slane %v1195, %v1229
  %v1231 = vlaneseq
  %v1232 = vshrl.u32 %v1231, 7
  %v1233 = vsub.s32 %v1222, %v1232
  %v1234 = vrot.slane %v1198, %v1233
  %v1235 = vlaneseq
  %v1236 = vshrl.u32 %v1235, 7
  %v1237 = vsub.s32 %v1222, %v1236
  %v1238 = vrot.slane %v1201, %v1237
  %v1239 = vlaneseq
  %v1240 = vshrl.u32 %v1239, 7
  %v1241 = vsub.s32 %v1222, %v1240
  %v1242 = vrot.slane %v1204, %v1241
  %v1243 = vlaneseq
  %v1244 = vshrl.u32 %v1243, 7
  %v1245 = vsub.s32 %v1222, %v1244
  %v1246 = vrot.slane %v1207, %v1245
  %v1247 = vlaneseq
  %v1248 = vshrl.u32 %v1247, 7
  %v1249 = vsub.s32 %v1222, %v1248
  %v1250 = vrot.slane %v1210, %v1249
  %v1251 = vlaneseq
  %v1252 = vshrl.u32 %v1251, 7
  %v1253 = vsub.s32 %v1222, %v1252
  %v1254 = vrot.slane %v1213, %v1253
  %v1255 = vsel %vm655, %v1230, %v1226
  %v1256 = vsel %vm657, %v1234, %v1255
  %v1257 = vsel %vm659, %v1238, %v1256
  %v1258 = vsel %vm661, %v1242, %v1257
  %v1259 = vsel %vm663, %v1246, %v1258
  %v1260 = vsel %vm665, %v1250, %v1259
  %v1261 = vsel %vm667, %v1254, %v1260
  %v1263 = vsel %vm207, %v1261, -1e+30
  %vm1264 = vcmask 720512
  %v1265 = vsel %vm1264, %v1263, -inf
  %1266 = vmax.xlane.f32.xlu0 %v1265
  %v1267 = vpop.xlane.xlu0 %1266
  %v1268 = vsub.f32 %v1263, %v1267
  %v1269 = vmul.f32 %v1268, 1.442695
  %v1270 = vpow.pop %v1269
  %1272 = vrot.lane.b32.xlu0 %v1270, 48
  %v1273 = vpop.permute.xlu0 %1272
  %v1275 = vsel %vm224, %v1273, 0.0
  %1276 = vadd.xlane.f32.xlu0 %v1275
  %v1277 = vpop.xlane.xlu0 %1276
  %v1278 = vrcp.pop %v1277
  %v1279 = vmul.f32 %v1270, %v1278
  %vm1280 = vcmp.eq.f32.partialorder %v1263, %v1267
  %1281 = vrot.lane.b32.xlu0 %v231, 80
  %v1282 = vpop.permute.xlu0 %1281
  %v1283 = vsel %vm1280, %v1282, 8
  %v1284 = vsel %vm1264, %v1283, 2147483647
  %v1285 = vand.u32 %v1284, 65535
  %v1286 = vshra.s32 %v1284, 16
  %v1287 = vcvt.s32.f32 %v1285
  %v1288 = vcvt.s32.f32 %v1286
  %1289 = vmin.xlane.f32.xlu0 %v1288
  %v1290 = vpop.xlane.xlu0 %1289
  %vm1291 = vcmp.eq.f32.partialorder %v1288, %v1290
  %v1292 = vsel %vm1291, %v1287, inf
  %1293 = vmin.xlane.f32.xlu0 %v1292
  %v1294 = vpop.xlane.xlu0 %1293
  %v1295 = vcvt.f32.s32 %v1294
  %v1296 = vcvt.f32.s32 %v1290
  %v1297 = vshll.u32 %v1296, 16
  %v1298 = vadd.s32 %v1297, %v1295
  %vm1299 = vcmp.eq.s32.totalorder %v231, %v1298
  %v1300 = vsel %vm1299, 1, 0
  %v1301 = vcvt.s32.f32 %v1300
  %v1302 = vlaneseq
  %v1303 = vshrl.u32 %v1302, 7
  %v1304 = vsub.s32 0, %v1303
  %v1305 = vrot.slane %v1301, %v1304
  %1307 = vbcast.lane.b32.xlu0 %v1305, 256
  %v1308 = vpop.permute.xlu0 %1307
  %v1309 = vlaneseq
  %v1310 = vshrl.u32 %v1309, 7
  %v1311 = vsub.s32 1, %v1310
  %v1312 = vrot.slane %v1301, %v1311
  %1314 = vbcast.lane.b32.xlu0 %v1312, 256
  %v1315 = vpop.permute.xlu0 %1314
  %v1316 = vlaneseq
  %v1317 = vshrl.u32 %v1316, 7
  %v1318 = vsub.s32 2, %v1317
  %v1319 = vrot.slane %v1301, %v1318
  %1321 = vbcast.lane.b32.xlu0 %v1319, 256
  %v1322 = vpop.permute.xlu0 %1321
  %v1323 = vlaneseq
  %v1324 = vshrl.u32 %v1323, 7
  %v1325 = vsub.s32 3, %v1324
  %v1326 = vrot.slane %v1301, %v1325
  %1328 = vbcast.lane.b32.xlu0 %v1326, 256
  %v1329 = vpop.permute.xlu0 %1328
  %v1330 = vlaneseq
  %v1331 = vshrl.u32 %v1330, 7
  %v1332 = vsub.s32 4, %v1331
  %v1333 = vrot.slane %v1301, %v1332
  %1335 = vbcast.lane.b32.xlu0 %v1333, 256
  %v1336 = vpop.permute.xlu0 %1335
  %v1337 = vlaneseq
  %v1338 = vshrl.u32 %v1337, 7
  %v1339 = vsub.s32 5, %v1338
  %v1340 = vrot.slane %v1301, %v1339
  %1342 = vbcast.lane.b32.xlu0 %v1340, 256
  %v1343 = vpop.permute.xlu0 %1342
  %v1344 = vlaneseq
  %v1345 = vshrl.u32 %v1344, 7
  %v1346 = vsub.s32 6, %v1345
  %v1347 = vrot.slane %v1301, %v1346
  %1349 = vbcast.lane.b32.xlu0 %v1347, 256
  %v1350 = vpop.permute.xlu0 %1349
  %v1351 = vlaneseq
  %v1352 = vshrl.u32 %v1351, 7
  %v1353 = vsub.s32 7, %v1352
  %v1354 = vrot.slane %v1301, %v1353
  %1356 = vbcast.lane.b32.xlu0 %v1354, 256
  %v1357 = vpop.permute.xlu0 %1356
  %v1358 = vmul.f32 %v1308, %v21
  %v1359 = vmul.f32 %v1315, %v23
  %v1360 = vmul.f32 %v1322, %v25
  %v1361 = vmul.f32 %v1329, %v27
  %v1362 = vmul.f32 %v1336, %v29
  %v1363 = vmul.f32 %v1343, %v31
  %v1364 = vmul.f32 %v1350, %v33
  %v1365 = vmul.f32 %v1357, %v35
  %v1366 = vsel %vm133, %v1358, 0.0
  %v1367 = vrot.slane %v1366, 4
  %v1368 = vadd.f32 %v1366, %v1367
  %v1369 = vrot.slane %v1368, 2
  %v1370 = vadd.f32 %v1368, %v1369
  %v1371 = vrot.slane %v1370, 1
  %v1372 = vadd.f32 %v1370, %v1371
  %v1373 = vsel %vm133, %v1359, 0.0
  %v1374 = vrot.slane %v1373, 4
  %v1375 = vadd.f32 %v1373, %v1374
  %v1376 = vrot.slane %v1375, 2
  %v1377 = vadd.f32 %v1375, %v1376
  %v1378 = vrot.slane %v1377, 1
  %v1379 = vadd.f32 %v1377, %v1378
  %v1380 = vsel %vm133, %v1360, 0.0
  %v1381 = vrot.slane %v1380, 4
  %v1382 = vadd.f32 %v1380, %v1381
  %v1383 = vrot.slane %v1382, 2
  %v1384 = vadd.f32 %v1382, %v1383
  %v1385 = vrot.slane %v1384, 1
  %v1386 = vadd.f32 %v1384, %v1385
  %v1387 = vsel %vm133, %v1361, 0.0
  %v1388 = vrot.slane %v1387, 4
  %v1389 = vadd.f32 %v1387, %v1388
  %v1390 = vrot.slane %v1389, 2
  %v1391 = vadd.f32 %v1389, %v1390
  %v1392 = vrot.slane %v1391, 1
  %v1393 = vadd.f32 %v1391, %v1392
  %v1394 = vsel %vm133, %v1362, 0.0
  %v1395 = vrot.slane %v1394, 4
  %v1396 = vadd.f32 %v1394, %v1395
  %v1397 = vrot.slane %v1396, 2
  %v1398 = vadd.f32 %v1396, %v1397
  %v1399 = vrot.slane %v1398, 1
  %v1400 = vadd.f32 %v1398, %v1399
  %v1401 = vsel %vm133, %v1363, 0.0
  %v1402 = vrot.slane %v1401, 4
  %v1403 = vadd.f32 %v1401, %v1402
  %v1404 = vrot.slane %v1403, 2
  %v1405 = vadd.f32 %v1403, %v1404
  %v1406 = vrot.slane %v1405, 1
  %v1407 = vadd.f32 %v1405, %v1406
  %v1408 = vsel %vm133, %v1364, 0.0
  %v1409 = vrot.slane %v1408, 4
  %v1410 = vadd.f32 %v1408, %v1409
  %v1411 = vrot.slane %v1410, 2
  %v1412 = vadd.f32 %v1410, %v1411
  %v1413 = vrot.slane %v1412, 1
  %v1414 = vadd.f32 %v1412, %v1413
  %v1415 = vsel %vm133, %v1365, 0.0
  %v1416 = vrot.slane %v1415, 4
  %v1417 = vadd.f32 %v1415, %v1416
  %v1418 = vrot.slane %v1417, 2
  %v1419 = vadd.f32 %v1417, %v1418
  %v1420 = vrot.slane %v1419, 1
  %v1421 = vadd.f32 %v1419, %v1420
  %vm1422 = vcmp.eq.s32.totalorder %v250, 1
  %v1423 = vsel %vm1422, 1, 0
  %v1424 = vcvt.s32.f32 %v1423
  %v1425 = vld [vmem:[%s2 + $0x108] sm:$0xff]
  %v1426 = vld [vmem:[%s2 + $0x110] sm:$0xff]
  %v1427 = vld [vmem:[%s2 + $0x118] sm:$0xff]
  %v1428 = vld [vmem:[%s2 + $0x120] sm:$0xff]
  %v1429 = vlaneseq
  %v1430 = vshrl.u32 %v1429, 7
  %v1431 = vsub.s32 7, %v1430
  %v1432 = vrot.slane %v36, %v1431
  %v1441 = vsel %vm655, %v1379, %v1372
  %v1442 = vsel %vm657, %v1386, %v1441
  %v1443 = vsel %vm659, %v1393, %v1442
  %v1444 = vsel %vm661, %v1400, %v1443
  %v1445 = vsel %vm663, %v1407, %v1444
  %v1446 = vsel %vm665, %v1414, %v1445
  %v1447 = vsel %vm667, %v1421, %v1446
  %v1448 = vsel %vm133, %v1447, 0
  %1450 = vmatprep.subr.mxu0 0.0
  %1451 = vmatpush1.msra.mxu0 %v1425
  %1452 = vmatprep.subr.mxu0 0.0
  %1453 = vmatpush1.msra.mxu0 %v1426
  %1454 = vmatprep.subr.mxu0 0.0
  %1455 = vmatpush1.msra.mxu0 %v1427
  %1456 = vmatprep.subr.mxu0 0.0
  %1457 = vmatpush1.msra.mxu0 %v1428
  %1458 = vmatprep.subr.mxu0 0.0
  %1459 = vmatpush1.msra.mxu0 0.0
  %1460 = vmatprep.subr.mxu0 0.0
  %1461 = vmatpush1.msra.mxu0 0.0
  %1462 = vmatprep.subr.mxu0 0.0
  %1463 = vmatpush1.msra.mxu0 0.0
  %1464 = vmatprep.subr.mxu0 0.0
  %1465 = vmatpush1.msra.mxu0 0.0
  %1466 = vmatprep.subr.mxu0 0.0
  %1467 = vmatpush1.msra.mxu0 0.0
  %1468 = vmatprep.subr.mxu0 0.0
  %1469 = vmatpush1.msra.mxu0 0.0
  %1470 = vmatprep.subr.mxu0 0.0
  %1471 = vmatpush1.msra.mxu0 0.0
  %1472 = vmatprep.subr.mxu0 0.0
  %1473 = vmatpush1.msra.mxu0 0.0
  %1474 = vmatprep.subr.mxu0 0.0
  %1475 = vmatpush1.msra.mxu0 0.0
  %1476 = vmatprep.subr.mxu0 0.0
  %1477 = vmatpush1.msra.mxu0 0.0
  %1478 = vmatprep.subr.mxu0 0.0
  %1479 = vmatpush1.msra.mxu0 0.0
  %1480 = vmatprep.subr.mxu0 0.0
  %1481 = vmatpush1.msra.mxu0 0.0
  %1482 = vmatprep.subr.mxu0 0.0
  %1483 = vmatpush1.msra.mxu0 0.0
  %1484 = vmatprep.subr.mxu0 0.0
  %1485 = vmatpush1.msra.mxu0 0.0
  %1486 = vmatprep.subr.mxu0 0.0
  %1487 = vmatpush1.msra.mxu0 0.0
  %1488 = vmatprep.subr.mxu0 0.0
  %1489 = vmatpush1.msra.mxu0 0.0
  %1490 = vmatprep.subr.mxu0 0.0
  %1491 = vmatpush1.msra.mxu0 0.0
  %1492 = vmatprep.subr.mxu0 0.0
  %1493 = vmatpush1.msra.mxu0 0.0
  %1494 = vmatprep.subr.mxu0 0.0
  %1495 = vmatpush1.msra.mxu0 0.0
  %1496 = vmatprep.subr.mxu0 0.0
  %1497 = vmatpush1.msra.mxu0 0.0
  %1498 = vmatprep.subr.mxu0 0.0
  %1499 = vmatpush1.msra.mxu0 0.0
  %1500 = vmatprep.subr.mxu0 0.0
  %1501 = vmatpush1.msra.mxu0 0.0
  %1502 = vmatprep.subr.mxu0 0.0
  %1503 = vmatpush1.msra.mxu0 0.0
  %1504 = vmatprep.subr.mxu0 0.0
  %1505 = vmatpush1.msra.mxu0 0.0
  %1506 = vmatprep.subr.mxu0 0.0
  %1507 = vmatpush1.msra.mxu0 0.0
  %1508 = vmatprep.subr.mxu0 0.0
  %1509 = vmatpush1.msra.mxu0 0.0
  %1510 = vmatprep.subr.mxu0 0.0
  %1511 = vmatpush1.msra.mxu0 0.0
  %1512 = vmatprep.subr.mxu0 0.0
  %1513 = vmatpush1.msra.mxu0 0.0
  %1514 = vmatprep.mubr.f32.mxu0 0.0
  %1515 = vmatmul.mubr.f32.gmra.mrb[0].mxu0 %v1448
  %v1516 = vpop.f32.mrb[0].mxu0
  %v1517 = vadd.f32 %v1432, %v1516
  %v1518 = vpop.f32.mrb[0].mxu0
  %1519 = vdwg.mxu0
  %v1520 = vmul.f32 %v1424, %v1517
  %v1521 = vadd.f32 %v928, %v1520
  %v1522 = vld [vmem:[%s2 + $0x128] sm:$0xff]
  %v1523 = vld [vmem:[%s2 + $0x130] sm:$0xff]
  %v1524 = vld [vmem:[%s2 + $0x138] sm:$0xff]
  %v1525 = vld [vmem:[%s2 + $0x140] sm:$0xff]
  %v1526 = vlaneseq
  %v1527 = vshrl.u32 %v1526, 7
  %v1528 = vsub.s32 0, %v1527
  %v1529 = vrot.slane %v37, %v1528
  %v1531 = vsel %vm133, %v1521, 0
  %1533 = vmatprep.subr.mxu0 0.0
  %1534 = vmatpush1.msra.mxu0 %v1522
  %1535 = vmatprep.subr.mxu0 0.0
  %1536 = vmatpush1.msra.mxu0 %v1523
  %1537 = vmatprep.subr.mxu0 0.0
  %1538 = vmatpush1.msra.mxu0 %v1524
  %1539 = vmatprep.subr.mxu0 0.0
  %1540 = vmatpush1.msra.mxu0 %v1525
  %1541 = vmatprep.subr.mxu0 0.0
  %1542 = vmatpush1.msra.mxu0 0.0
  %1543 = vmatprep.subr.mxu0 0.0
  %1544 = vmatpush1.msra.mxu0 0.0
  %1545 = vmatprep.subr.mxu0 0.0
  %1546 = vmatpush1.msra.mxu0 0.0
  %1547 = vmatprep.subr.mxu0 0.0
  %1548 = vmatpush1.msra.mxu0 0.0
  %1549 = vmatprep.subr.mxu0 0.0
  %1550 = vmatpush1.msra.mxu0 0.0
  %1551 = vmatprep.subr.mxu0 0.0
  %1552 = vmatpush1.msra.mxu0 0.0
  %1553 = vmatprep.subr.mxu0 0.0
  %1554 = vmatpush1.msra.mxu0 0.0
  %1555 = vmatprep.subr.mxu0 0.0
  %1556 = vmatpush1.msra.mxu0 0.0
  %1557 = vmatprep.subr.mxu0 0.0
  %1558 = vmatpush1.msra.mxu0 0.0
  %1559 = vmatprep.subr.mxu0 0.0
  %1560 = vmatpush1.msra.mxu0 0.0
  %1561 = vmatprep.subr.mxu0 0.0
  %1562 = vmatpush1.msra.mxu0 0.0
  %1563 = vmatprep.subr.mxu0 0.0
  %1564 = vmatpush1.msra.mxu0 0.0
  %1565 = vmatprep.subr.mxu0 0.0
  %1566 = vmatpush1.msra.mxu0 0.0
  %1567 = vmatprep.subr.mxu0 0.0
  %1568 = vmatpush1.msra.mxu0 0.0
  %1569 = vmatprep.subr.mxu0 0.0
  %1570 = vmatpush1.msra.mxu0 0.0
  %1571 = vmatprep.subr.mxu0 0.0
  %1572 = vmatpush1.msra.mxu0 0.0
  %1573 = vmatprep.subr.mxu0 0.0
  %1574 = vmatpush1.msra.mxu0 0.0
  %1575 = vmatprep.subr.mxu0 0.0
  %1576 = vmatpush1.msra.mxu0 0.0
  %1577 = vmatprep.subr.mxu0 0.0
  %1578 = vmatpush1.msra.mxu0 0.0
  %1579 = vmatprep.subr.mxu0 0.0
  %1580 = vmatpush1.msra.mxu0 0.0
  %1581 = vmatprep.subr.mxu0 0.0
  %1582 = vmatpush1.msra.mxu0 0.0
  %1583 = vmatprep.subr.mxu0 0.0
  %1584 = vmatpush1.msra.mxu0 0.0
  %1585 = vmatprep.subr.mxu0 0.0
  %1586 = vmatpush1.msra.mxu0 0.0
  %1587 = vmatprep.subr.mxu0 0.0
  %1588 = vmatpush1.msra.mxu0 0.0
  %1589 = vmatprep.subr.mxu0 0.0
  %1590 = vmatpush1.msra.mxu0 0.0
  %1591 = vmatprep.subr.mxu0 0.0
  %1592 = vmatpush1.msra.mxu0 0.0
  %1593 = vmatprep.subr.mxu0 0.0
  %1594 = vmatpush1.msra.mxu0 0.0
  %1595 = vmatprep.subr.mxu0 0.0
  %1596 = vmatpush1.msra.mxu0 0.0
  %1597 = vmatprep.mubr.f32.mxu0 0.0
  %1598 = vmatmul.mubr.f32.gmra.mrb[0].mxu0 %v1531
  %v1599 = vpop.f32.mrb[0].mxu0
  %v1600 = vadd.f32 %v1529, %v1599
  %v1601 = vpop.f32.mrb[0].mxu0
  %1602 = vdwg.mxu0
  %v1603 = vmax.f32 %v1600, 0.0
  %v1604 = vld [vmem:[%s2 + $0x148] sm:$0xff]
  %v1605 = vld [vmem:[%s2 + $0x150] sm:$0xff]
  %v1606 = vld [vmem:[%s2 + $0x158] sm:$0xff]
  %v1607 = vld [vmem:[%s2 + $0x160] sm:$0xff]
  %v1608 = vlaneseq
  %v1609 = vshrl.u32 %v1608, 7
  %v1610 = vsub.s32 1, %v1609
  %v1611 = vrot.slane %v37, %v1610
  %v1613 = vsel %vm133, %v1603, 0
  %1615 = vmatprep.subr.mxu0 0.0
  %1616 = vmatpush1.msra.mxu0 %v1604
  %1617 = vmatprep.subr.mxu0 0.0
  %1618 = vmatpush1.msra.mxu0 %v1605
  %1619 = vmatprep.subr.mxu0 0.0
  %1620 = vmatpush1.msra.mxu0 %v1606
  %1621 = vmatprep.subr.mxu0 0.0
  %1622 = vmatpush1.msra.mxu0 %v1607
  %1623 = vmatprep.subr.mxu0 0.0
  %1624 = vmatpush1.msra.mxu0 0.0
  %1625 = vmatprep.subr.mxu0 0.0
  %1626 = vmatpush1.msra.mxu0 0.0
  %1627 = vmatprep.subr.mxu0 0.0
  %1628 = vmatpush1.msra.mxu0 0.0
  %1629 = vmatprep.subr.mxu0 0.0
  %1630 = vmatpush1.msra.mxu0 0.0
  %1631 = vmatprep.subr.mxu0 0.0
  %1632 = vmatpush1.msra.mxu0 0.0
  %1633 = vmatprep.subr.mxu0 0.0
  %1634 = vmatpush1.msra.mxu0 0.0
  %1635 = vmatprep.subr.mxu0 0.0
  %1636 = vmatpush1.msra.mxu0 0.0
  %1637 = vmatprep.subr.mxu0 0.0
  %1638 = vmatpush1.msra.mxu0 0.0
  %1639 = vmatprep.subr.mxu0 0.0
  %1640 = vmatpush1.msra.mxu0 0.0
  %1641 = vmatprep.subr.mxu0 0.0
  %1642 = vmatpush1.msra.mxu0 0.0
  %1643 = vmatprep.subr.mxu0 0.0
  %1644 = vmatpush1.msra.mxu0 0.0
  %1645 = vmatprep.subr.mxu0 0.0
  %1646 = vmatpush1.msra.mxu0 0.0
  %1647 = vmatprep.subr.mxu0 0.0
  %1648 = vmatpush1.msra.mxu0 0.0
  %1649 = vmatprep.subr.mxu0 0.0
  %1650 = vmatpush1.msra.mxu0 0.0
  %1651 = vmatprep.subr.mxu0 0.0
  %1652 = vmatpush1.msra.mxu0 0.0
  %1653 = vmatprep.subr.mxu0 0.0
  %1654 = vmatpush1.msra.mxu0 0.0
  %1655 = vmatprep.subr.mxu0 0.0
  %1656 = vmatpush1.msra.mxu0 0.0
  %1657 = vmatprep.subr.mxu0 0.0
  %1658 = vmatpush1.msra.mxu0 0.0
  %1659 = vmatprep.subr.mxu0 0.0
  %1660 = vmatpush1.msra.mxu0 0.0
  %1661 = vmatprep.subr.mxu0 0.0
  %1662 = vmatpush1.msra.mxu0 0.0
  %1663 = vmatprep.subr.mxu0 0.0
  %1664 = vmatpush1.msra.mxu0 0.0
  %1665 = vmatprep.subr.mxu0 0.0
  %1666 = vmatpush1.msra.mxu0 0.0
  %1667 = vmatprep.subr.mxu0 0.0
  %1668 = vmatpush1.msra.mxu0 0.0
  %1669 = vmatprep.subr.mxu0 0.0
  %1670 = vmatpush1.msra.mxu0 0.0
  %1671 = vmatprep.subr.mxu0 0.0
  %1672 = vmatpush1.msra.mxu0 0.0
  %1673 = vmatprep.subr.mxu0 0.0
  %1674 = vmatpush1.msra.mxu0 0.0
  %1675 = vmatprep.subr.mxu0 0.0
  %1676 = vmatpush1.msra.mxu0 0.0
  %1677 = vmatprep.subr.mxu0 0.0
  %1678 = vmatpush1.msra.mxu0 0.0
  %1679 = vmatprep.mubr.f32.mxu0 0.0
  %1680 = vmatmul.mubr.f32.gmra.mrb[0].mxu0 %v1613
  %v1681 = vpop.f32.mrb[0].mxu0
  %v1682 = vadd.f32 %v1611, %v1681
  %v1683 = vpop.f32.mrb[0].mxu0
  %1684 = vdwg.mxu0
  %1686 = vrot.lane.b32.xlu0 %v1682, 88
  %v1687 = vpop.permute.xlu0 %1686
  %v1689 = vsel %vm207, %v1687, -1e+30
  %vm1690 = vcmask 786112
  %v1691 = vsel %vm1690, %v1689, -inf
  %1692 = vmax.xlane.f32.xlu0 %v1691
  %v1693 = vpop.xlane.xlu0 %1692
  %v1694 = vsub.f32 %v1689, %v1693
  %v1695 = vmul.f32 %v1694, 1.442695
  %v1696 = vpow.pop %v1695
  %1698 = vrot.lane.b32.xlu0 %v1696, 40
  %v1699 = vpop.permute.xlu0 %1698
  %v1701 = vsel %vm224, %v1699, 0.0
  %1702 = vadd.xlane.f32.xlu0 %v1701
  %v1703 = vpop.xlane.xlu0 %1702
  %v1704 = vrcp.pop %v1703
  %v1705 = vmul.f32 %v1696, %v1704
  %vm1706 = vcmp.eq.f32.partialorder %v1689, %v1693
  %1707 = vrot.lane.b32.xlu0 %v231, 88
  %v1708 = vpop.permute.xlu0 %1707
  %v1709 = vsel %vm1706, %v1708, 8
  %v1710 = vsel %vm1690, %v1709, 2147483647
  %v1711 = vand.u32 %v1710, 65535
  %v1712 = vshra.s32 %v1710, 16
  %v1713 = vcvt.s32.f32 %v1711
  %v1714 = vcvt.s32.f32 %v1712
  %1715 = vmin.xlane.f32.xlu0 %v1714
  %v1716 = vpop.xlane.xlu0 %1715
  %vm1717 = vcmp.eq.f32.partialorder %v1714, %v1716
  %v1718 = vsel %vm1717, %v1713, inf
  %1719 = vmin.xlane.f32.xlu0 %v1718
  %v1720 = vpop.xlane.xlu0 %1719
  %v1721 = vcvt.f32.s32 %v1720
  %v1722 = vcvt.f32.s32 %v1716
  %v1723 = vshll.u32 %v1722, 16
  %v1724 = vadd.s32 %v1723, %v1721
  %vm1725 = vcmp.eq.s32.totalorder %v231, %v1724
  %v1726 = vsel %vm1725, 1, 0
  %v1727 = vcvt.s32.f32 %v1726
  %v1728 = vld [vmem:[%s2 + $0x168] sm:$0xff]
  %v1730 = vsel %vm224, %v1727, 0
  %1732 = vmatprep.subr.mxu0 0.0
  %1733 = vmatpush1.msra.mxu0 %v1728
  %1734 = vmatprep.subr.mxu0 0.0
  %1735 = vmatpush1.msra.mxu0 0.0
  %1736 = vmatprep.subr.mxu0 0.0
  %1737 = vmatpush1.msra.mxu0 0.0
  %1738 = vmatprep.subr.mxu0 0.0
  %1739 = vmatpush1.msra.mxu0 0.0
  %1740 = vmatprep.subr.mxu0 0.0
  %1741 = vmatpush1.msra.mxu0 0.0
  %1742 = vmatprep.subr.mxu0 0.0
  %1743 = vmatpush1.msra.mxu0 0.0
  %1744 = vmatprep.subr.mxu0 0.0
  %1745 = vmatpush1.msra.mxu0 0.0
  %1746 = vmatprep.subr.mxu0 0.0
  %1747 = vmatpush1.msra.mxu0 0.0
  %1748 = vmatprep.subr.mxu0 0.0
  %1749 = vmatpush1.msra.mxu0 0.0
  %1750 = vmatprep.subr.mxu0 0.0
  %1751 = vmatpush1.msra.mxu0 0.0
  %1752 = vmatprep.subr.mxu0 0.0
  %1753 = vmatpush1.msra.mxu0 0.0
  %1754 = vmatprep.subr.mxu0 0.0
  %1755 = vmatpush1.msra.mxu0 0.0
  %1756 = vmatprep.subr.mxu0 0.0
  %1757 = vmatpush1.msra.mxu0 0.0
  %1758 = vmatprep.subr.mxu0 0.0
  %1759 = vmatpush1.msra.mxu0 0.0
  %1760 = vmatprep.subr.mxu0 0.0
  %1761 = vmatpush1.msra.mxu0 0.0
  %1762 = vmatprep.subr.mxu0 0.0
  %1763 = vmatpush1.msra.mxu0 0.0
  %1764 = vmatprep.subr.mxu0 0.0
  %1765 = vmatpush1.msra.mxu0 0.0
  %1766 = vmatprep.subr.mxu0 0.0
  %1767 = vmatpush1.msra.mxu0 0.0
  %1768 = vmatprep.subr.mxu0 0.0
  %1769 = vmatpush1.msra.mxu0 0.0
  %1770 = vmatprep.subr.mxu0 0.0
  %1771 = vmatpush1.msra.mxu0 0.0
  %1772 = vmatprep.subr.mxu0 0.0
  %1773 = vmatpush1.msra.mxu0 0.0
  %1774 = vmatprep.subr.mxu0 0.0
  %1775 = vmatpush1.msra.mxu0 0.0
  %1776 = vmatprep.subr.mxu0 0.0
  %1777 = vmatpush1.msra.mxu0 0.0
  %1778 = vmatprep.subr.mxu0 0.0
  %1779 = vmatpush1.msra.mxu0 0.0
  %1780 = vmatprep.subr.mxu0 0.0
  %1781 = vmatpush1.msra.mxu0 0.0
  %1782 = vmatprep.subr.mxu0 0.0
  %1783 = vmatpush1.msra.mxu0 0.0
  %1784 = vmatprep.subr.mxu0 0.0
  %1785 = vmatpush1.msra.mxu0 0.0
  %1786 = vmatprep.subr.mxu0 0.0
  %1787 = vmatpush1.msra.mxu0 0.0
  %1788 = vmatprep.subr.mxu0 0.0
  %1789 = vmatpush1.msra.mxu0 0.0
  %1790 = vmatprep.subr.mxu0 0.0
  %1791 = vmatpush1.msra.mxu0 0.0
  %1792 = vmatprep.subr.mxu0 0.0
  %1793 = vmatpush1.msra.mxu0 0.0
  %1794 = vmatprep.subr.mxu0 0.0
  %1795 = vmatpush1.msra.mxu0 0.0
  %1796 = vmatprep.mubr.f32.mxu0 0.0
  %1797 = vmatmul.mubr.f32.gmra.mrb[0].mxu0 %v1730
  %v1798 = vpop.f32.mrb[0].mxu0
  %v1799 = vadd.f32 0.0, %v1798
  %v1800 = vpop.f32.mrb[0].mxu0
  %1801 = vdwg.mxu0
  %v1802 = vadd.f32 %v1521, %v1799
  %v1803 = vld [vmem:[%s2 + $0x170] sm:$0xff]
  %v1804 = vld [vmem:[%s2 + $0x178] sm:$0xff]
  %v1805 = vld [vmem:[%s2 + $0x180] sm:$0xff]
  %v1806 = vld [vmem:[%s2 + $0x188] sm:$0xff]
  %v1807 = vlaneseq
  %v1808 = vshrl.u32 %v1807, 7
  %v1809 = vsub.s32 2, %v1808
  %v1810 = vrot.slane %v37, %v1809
  %v1812 = vsel %vm133, %v1802, 0
  %1814 = vmatprep.subr.mxu0 0.0
  %1815 = vmatpush1.msra.mxu0 %v1803
  %1816 = vmatprep.subr.mxu0 0.0
  %1817 = vmatpush1.msra.mxu0 %v1804
  %1818 = vmatprep.subr.mxu0 0.0
  %1819 = vmatpush1.msra.mxu0 %v1805
  %1820 = vmatprep.subr.mxu0 0.0
  %1821 = vmatpush1.msra.mxu0 %v1806
  %1822 = vmatprep.subr.mxu0 0.0
  %1823 = vmatpush1.msra.mxu0 0.0
  %1824 = vmatprep.subr.mxu0 0.0
  %1825 = vmatpush1.msra.mxu0 0.0
  %1826 = vmatprep.subr.mxu0 0.0
  %1827 = vmatpush1.msra.mxu0 0.0
  %1828 = vmatprep.subr.mxu0 0.0
  %1829 = vmatpush1.msra.mxu0 0.0
  %1830 = vmatprep.subr.mxu0 0.0
  %1831 = vmatpush1.msra.mxu0 0.0
  %1832 = vmatprep.subr.mxu0 0.0
  %1833 = vmatpush1.msra.mxu0 0.0
  %1834 = vmatprep.subr.mxu0 0.0
  %1835 = vmatpush1.msra.mxu0 0.0
  %1836 = vmatprep.subr.mxu0 0.0
  %1837 = vmatpush1.msra.mxu0 0.0
  %1838 = vmatprep.subr.mxu0 0.0
  %1839 = vmatpush1.msra.mxu0 0.0
  %1840 = vmatprep.subr.mxu0 0.0
  %1841 = vmatpush1.msra.mxu0 0.0
  %1842 = vmatprep.subr.mxu0 0.0
  %1843 = vmatpush1.msra.mxu0 0.0
  %1844 = vmatprep.subr.mxu0 0.0
  %1845 = vmatpush1.msra.mxu0 0.0
  %1846 = vmatprep.subr.mxu0 0.0
  %1847 = vmatpush1.msra.mxu0 0.0
  %1848 = vmatprep.subr.mxu0 0.0
  %1849 = vmatpush1.msra.mxu0 0.0
  %1850 = vmatprep.subr.mxu0 0.0
  %1851 = vmatpush1.msra.mxu0 0.0
  %1852 = vmatprep.subr.mxu0 0.0
  %1853 = vmatpush1.msra.mxu0 0.0
  %1854 = vmatprep.subr.mxu0 0.0
  %1855 = vmatpush1.msra.mxu0 0.0
  %1856 = vmatprep.subr.mxu0 0.0
  %1857 = vmatpush1.msra.mxu0 0.0
  %1858 = vmatprep.subr.mxu0 0.0
  %1859 = vmatpush1.msra.mxu0 0.0
  %1860 = vmatprep.subr.mxu0 0.0
  %1861 = vmatpush1.msra.mxu0 0.0
  %1862 = vmatprep.subr.mxu0 0.0
  %1863 = vmatpush1.msra.mxu0 0.0
  %1864 = vmatprep.subr.mxu0 0.0
  %1865 = vmatpush1.msra.mxu0 0.0
  %1866 = vmatprep.subr.mxu0 0.0
  %1867 = vmatpush1.msra.mxu0 0.0
  %1868 = vmatprep.subr.mxu0 0.0
  %1869 = vmatpush1.msra.mxu0 0.0
  %1870 = vmatprep.subr.mxu0 0.0
  %1871 = vmatpush1.msra.mxu0 0.0
  %1872 = vmatprep.subr.mxu0 0.0
  %1873 = vmatpush1.msra.mxu0 0.0
  %1874 = vmatprep.subr.mxu0 0.0
  %1875 = vmatpush1.msra.mxu0 0.0
  %1876 = vmatprep.subr.mxu0 0.0
  %1877 = vmatpush1.msra.mxu0 0.0
  %1878 = vmatprep.mubr.f32.mxu0 0.0
  %1879 = vmatmul.mubr.f32.gmra.mrb[0].mxu0 %v1812
  %v1880 = vpop.f32.mrb[0].mxu0
  %v1881 = vadd.f32 %v1810, %v1880
  %v1882 = vpop.f32.mrb[0].mxu0
  %1883 = vdwg.mxu0
  %v1884 = vmax.f32 %v1881, 0.0
  %v1885 = vld [vmem:[%s2 + $0x190] sm:$0xff]
  %v1886 = vld [vmem:[%s2 + $0x198] sm:$0xff]
  %v1887 = vld [vmem:[%s2 + $0x1a0] sm:$0xff]
  %v1888 = vld [vmem:[%s2 + $0x1a8] sm:$0xff]
  %v1889 = vlaneseq
  %v1890 = vshrl.u32 %v1889, 7
  %v1891 = vsub.s32 3, %v1890
  %v1892 = vrot.slane %v37, %v1891
  %v1894 = vsel %vm133, %v1884, 0
  %1896 = vmatprep.subr.mxu0 0.0
  %1897 = vmatpush1.msra.mxu0 %v1885
  %1898 = vmatprep.subr.mxu0 0.0
  %1899 = vmatpush1.msra.mxu0 %v1886
  %1900 = vmatprep.subr.mxu0 0.0
  %1901 = vmatpush1.msra.mxu0 %v1887
  %1902 = vmatprep.subr.mxu0 0.0
  %1903 = vmatpush1.msra.mxu0 %v1888
  %1904 = vmatprep.subr.mxu0 0.0
  %1905 = vmatpush1.msra.mxu0 0.0
  %1906 = vmatprep.subr.mxu0 0.0
  %1907 = vmatpush1.msra.mxu0 0.0
  %1908 = vmatprep.subr.mxu0 0.0
  %1909 = vmatpush1.msra.mxu0 0.0
  %1910 = vmatprep.subr.mxu0 0.0
  %1911 = vmatpush1.msra.mxu0 0.0
  %1912 = vmatprep.subr.mxu0 0.0
  %1913 = vmatpush1.msra.mxu0 0.0
  %1914 = vmatprep.subr.mxu0 0.0
  %1915 = vmatpush1.msra.mxu0 0.0
  %1916 = vmatprep.subr.mxu0 0.0
  %1917 = vmatpush1.msra.mxu0 0.0
  %1918 = vmatprep.subr.mxu0 0.0
  %1919 = vmatpush1.msra.mxu0 0.0
  %1920 = vmatprep.subr.mxu0 0.0
  %1921 = vmatpush1.msra.mxu0 0.0
  %1922 = vmatprep.subr.mxu0 0.0
  %1923 = vmatpush1.msra.mxu0 0.0
  %1924 = vmatprep.subr.mxu0 0.0
  %1925 = vmatpush1.msra.mxu0 0.0
  %1926 = vmatprep.subr.mxu0 0.0
  %1927 = vmatpush1.msra.mxu0 0.0
  %1928 = vmatprep.subr.mxu0 0.0
  %1929 = vmatpush1.msra.mxu0 0.0
  %1930 = vmatprep.subr.mxu0 0.0
  %1931 = vmatpush1.msra.mxu0 0.0
  %1932 = vmatprep.subr.mxu0 0.0
  %1933 = vmatpush1.msra.mxu0 0.0
  %1934 = vmatprep.subr.mxu0 0.0
  %1935 = vmatpush1.msra.mxu0 0.0
  %1936 = vmatprep.subr.mxu0 0.0
  %1937 = vmatpush1.msra.mxu0 0.0
  %1938 = vmatprep.subr.mxu0 0.0
  %1939 = vmatpush1.msra.mxu0 0.0
  %1940 = vmatprep.subr.mxu0 0.0
  %1941 = vmatpush1.msra.mxu0 0.0
  %1942 = vmatprep.subr.mxu0 0.0
  %1943 = vmatpush1.msra.mxu0 0.0
  %1944 = vmatprep.subr.mxu0 0.0
  %1945 = vmatpush1.msra.mxu0 0.0
  %1946 = vmatprep.subr.mxu0 0.0
  %1947 = vmatpush1.msra.mxu0 0.0
  %1948 = vmatprep.subr.mxu0 0.0
  %1949 = vmatpush1.msra.mxu0 0.0
  %1950 = vmatprep.subr.mxu0 0.0
  %1951 = vmatpush1.msra.mxu0 0.0
  %1952 = vmatprep.subr.mxu0 0.0
  %1953 = vmatpush1.msra.mxu0 0.0
  %1954 = vmatprep.subr.mxu0 0.0
  %1955 = vmatpush1.msra.mxu0 0.0
  %1956 = vmatprep.subr.mxu0 0.0
  %1957 = vmatpush1.msra.mxu0 0.0
  %1958 = vmatprep.subr.mxu0 0.0
  %1959 = vmatpush1.msra.mxu0 0.0
  %1960 = vmatprep.mubr.f32.mxu0 0.0
  %1961 = vmatmul.mubr.f32.gmra.mrb[0].mxu0 %v1894
  %v1962 = vpop.f32.mrb[0].mxu0
  %v1963 = vadd.f32 %v1892, %v1962
  %v1964 = vpop.f32.mrb[0].mxu0
  %1965 = vdwg.mxu0
  %v1967 = vcombine.high %v1963, %v1963
  %v1969 = vunpack.c.l.s4 1966171168
  %v1970 = vunpack.c.0.s8 %v1969
  %v1971 = vlaneseq
  %v1972 = vshrl.u32 %v1971, 7
  %v1973 = vsub.s32 %v1970, %v1972
  %v1974 = vrot.slane %v1963, %v1973
  %v1976 = vunpack.c.l.s4 1966171168
  %v1977 = vunpack.c.0.s8 %v1976
  %v1978 = vlaneseq
  %v1979 = vshrl.u32 %v1978, 7
  %v1980 = vsub.s32 %v1977, %v1979
  %v1981 = vrot.slane %v1967, %v1980
  %v1982 = vcombine.high %v1974, %v1974
  %v1983 = vcombine.high %v1981, %v1981
  %v1985 = vunpack.c.l.s4 1966171168
  %v1986 = vunpack.c.0.s8 %v1985
  %v1987 = vlaneseq
  %v1988 = vshrl.u32 %v1987, 7
  %v1989 = vsub.s32 %v1986, %v1988
  %v1990 = vrot.slane %v1974, %v1989
  %v1992 = vunpack.c.l.s4 1966171168
  %v1993 = vunpack.c.0.s8 %v1992
  %v1994 = vlaneseq
  %v1995 = vshrl.u32 %v1994, 7
  %v1996 = vsub.s32 %v1993, %v1995
  %v1997 = vrot.slane %v1981, %v1996
  %v1999 = vunpack.c.l.s4 1966171168
  %v2000 = vunpack.c.0.s8 %v1999
  %v2001 = vlaneseq
  %v2002 = vshrl.u32 %v2001, 7
  %v2003 = vsub.s32 %v2000, %v2002
  %v2004 = vrot.slane %v1982, %v2003
  %v2006 = vunpack.c.l.s4 1966171168
  %v2007 = vunpack.c.0.s8 %v2006
  %v2008 = vlaneseq
  %v2009 = vshrl.u32 %v2008, 7
  %v2010 = vsub.s32 %v2007, %v2009
  %v2011 = vrot.slane %v1983, %v2010
  %v2012 = vcombine.high %v1990, %v1990
  %v2013 = vcombine.high %v1997, %v1997
  %v2014 = vcombine.high %v2004, %v2004
  %v2015 = vcombine.high %v2011, %v2011
  %v2016 = vlaneseq
  %v2017 = vshrl.u32 %v2016, 7
  %v2018 = vsub.s32 0, %v2017
  %v2019 = vrot.slane %v1990, %v2018
  %v2020 = vlaneseq
  %v2021 = vshrl.u32 %v2020, 7
  %v2022 = vsub.s32 0, %v2021
  %v2023 = vrot.slane %v2004, %v2022
  %v2024 = vlaneseq
  %v2025 = vshrl.u32 %v2024, 7
  %v2026 = vsub.s32 0, %v2025
  %v2027 = vrot.slane %v2012, %v2026
  %v2028 = vlaneseq
  %v2029 = vshrl.u32 %v2028, 7
  %v2030 = vsub.s32 0, %v2029
  %v2031 = vrot.slane %v2014, %v2030
  %v2032 = vlaneseq
  %v2033 = vshrl.u32 %v2032, 7
  %v2034 = vsub.s32 0, %v2033
  %v2035 = vrot.slane %v1997, %v2034
  %v2036 = vlaneseq
  %v2037 = vshrl.u32 %v2036, 7
  %v2038 = vsub.s32 0, %v2037
  %v2039 = vrot.slane %v2011, %v2038
  %v2040 = vlaneseq
  %v2041 = vshrl.u32 %v2040, 7
  %v2042 = vsub.s32 0, %v2041
  %v2043 = vrot.slane %v2013, %v2042
  %v2044 = vlaneseq
  %v2045 = vshrl.u32 %v2044, 7
  %v2046 = vsub.s32 0, %v2045
  %v2047 = vrot.slane %v2015, %v2046
  %v2056 = vmul.f32 %v2019, %v20
  %v2057 = vmul.f32 %v2023, %v22
  %v2058 = vmul.f32 %v2027, %v24
  %v2059 = vmul.f32 %v2031, %v26
  %v2060 = vmul.f32 %v2035, %v28
  %v2061 = vmul.f32 %v2039, %v30
  %v2062 = vmul.f32 %v2043, %v32
  %v2063 = vmul.f32 %v2047, %v34
  %v2064 = vsel %vm133, %v2056, 0.0
  %2065 = vadd.xlane.f32.xlu0 %v2064
  %v2066 = vpop.xlane.xlu0 %2065
  %v2067 = vsel %vm133, %v2057, 0.0
  %2068 = vadd.xlane.f32.xlu0 %v2067
  %v2069 = vpop.xlane.xlu0 %2068
  %v2070 = vsel %vm133, %v2058, 0.0
  %2071 = vadd.xlane.f32.xlu0 %v2070
  %v2072 = vpop.xlane.xlu0 %2071
  %v2073 = vsel %vm133, %v2059, 0.0
  %2074 = vadd.xlane.f32.xlu0 %v2073
  %v2075 = vpop.xlane.xlu0 %2074
  %v2076 = vsel %vm133, %v2060, 0.0
  %2077 = vadd.xlane.f32.xlu0 %v2076
  %v2078 = vpop.xlane.xlu0 %2077
  %v2079 = vsel %vm133, %v2061, 0.0
  %2080 = vadd.xlane.f32.xlu0 %v2079
  %v2081 = vpop.xlane.xlu0 %2080
  %v2082 = vsel %vm133, %v2062, 0.0
  %2083 = vadd.xlane.f32.xlu0 %v2082
  %v2084 = vpop.xlane.xlu0 %2083
  %v2085 = vsel %vm133, %v2063, 0.0
  %2086 = vadd.xlane.f32.xlu0 %v2085
  %v2087 = vpop.xlane.xlu0 %2086
  %v2096 = vadd.s32 %v231, 4294967200
  %v2097 = vlaneseq
  %v2098 = vshrl.u32 %v2097, 7
  %v2099 = vsub.s32 %v2096, %v2098
  %v2100 = vrot.slane %v2066, %v2099
  %v2101 = vlaneseq
  %v2102 = vshrl.u32 %v2101, 7
  %v2103 = vsub.s32 %v2096, %v2102
  %v2104 = vrot.slane %v2069, %v2103
  %v2105 = vlaneseq
  %v2106 = vshrl.u32 %v2105, 7
  %v2107 = vsub.s32 %v2096, %v2106
  %v2108 = vrot.slane %v2072, %v2107
  %v2109 = vlaneseq
  %v2110 = vshrl.u32 %v2109, 7
  %v2111 = vsub.s32 %v2096, %v2110
  %v2112 = vrot.slane %v2075, %v2111
  %v2113 = vlaneseq
  %v2114 = vshrl.u32 %v2113, 7
  %v2115 = vsub.s32 %v2096, %v2114
  %v2116 = vrot.slane %v2078, %v2115
  %v2117 = vlaneseq
  %v2118 = vshrl.u32 %v2117, 7
  %v2119 = vsub.s32 %v2096, %v2118
  %v2120 = vrot.slane %v2081, %v2119
  %v2121 = vlaneseq
  %v2122 = vshrl.u32 %v2121, 7
  %v2123 = vsub.s32 %v2096, %v2122
  %v2124 = vrot.slane %v2084, %v2123
  %v2125 = vlaneseq
  %v2126 = vshrl.u32 %v2125, 7
  %v2127 = vsub.s32 %v2096, %v2126
  %v2128 = vrot.slane %v2087, %v2127
  %v2129 = vsel %vm655, %v2104, %v2100
  %v2130 = vsel %vm657, %v2108, %v2129
  %v2131 = vsel %vm659, %v2112, %v2130
  %v2132 = vsel %vm661, %v2116, %v2131
  %v2133 = vsel %vm663, %v2120, %v2132
  %v2134 = vsel %vm665, %v2124, %v2133
  %v2135 = vsel %vm667, %v2128, %v2134
  %v2137 = vsel %vm207, %v2135, -1e+30
  %vm2138 = vcmask 851712
  %v2139 = vsel %vm2138, %v2137, -inf
  %2140 = vmax.xlane.f32.xlu0 %v2139
  %v2141 = vpop.xlane.xlu0 %2140
  %v2142 = vsub.f32 %v2137, %v2141
  %v2143 = vmul.f32 %v2142, 1.442695
  %v2144 = vpow.pop %v2143
  %2146 = vrot.lane.b32.xlu0 %v2144, 32
  %v2147 = vpop.permute.xlu0 %2146
  %v2149 = vsel %vm224, %v2147, 0.0
  %2150 = vadd.xlane.f32.xlu0 %v2149
  %v2151 = vpop.xlane.xlu0 %2150
  %v2152 = vrcp.pop %v2151
  %v2153 = vmul.f32 %v2144, %v2152
  %vm2154 = vcmp.eq.f32.partialorder %v2137, %v2141
  %2155 = vrot.lane.b32.xlu0 %v231, 96
  %v2156 = vpop.permute.xlu0 %2155
  %v2157 = vsel %vm2154, %v2156, 8
  %v2158 = vsel %vm2138, %v2157, 2147483647
  %v2159 = vand.u32 %v2158, 65535
  %v2160 = vshra.s32 %v2158, 16
  %v2161 = vcvt.s32.f32 %v2159
  %v2162 = vcvt.s32.f32 %v2160
  %2163 = vmin.xlane.f32.xlu0 %v2162
  %v2164 = vpop.xlane.xlu0 %2163
  %vm2165 = vcmp.eq.f32.partialorder %v2162, %v2164
  %v2166 = vsel %vm2165, %v2161, inf
  %2167 = vmin.xlane.f32.xlu0 %v2166
  %v2168 = vpop.xlane.xlu0 %2167
  %v2169 = vcvt.f32.s32 %v2168
  %v2170 = vcvt.f32.s32 %v2164
  %v2171 = vshll.u32 %v2170, 16
  %v2172 = vadd.s32 %v2171, %v2169
  %2173 = vst [vmem:[%s4] sm:$0xff] 0.0
  %2175 = vrot.lane.b32.xlu0 %v212, 64
  %v2176 = vpop.permute.xlu0 %2175
  %2178 = vst.msk [vmem:[%s4] sm:$0xff] %vm224, %v2176
  %2180 = vrot.lane.b32.xlu0 %v670, 64
  %v2181 = vpop.permute.xlu0 %2180
  %vm2183 = vcmask 130112
  %2184 = vst.msk [vmem:[%s4] sm:$0xff] %vm2183, %v2181
  %2186 = vrot.lane.b32.xlu0 %v1263, 64
  %v2187 = vpop.permute.xlu0 %2186
  %vm2189 = vcmask 195712
  %2190 = vst.msk [vmem:[%s4] sm:$0xff] %vm2189, %v2187
  %2192 = vrot.lane.b32.xlu0 %v1689, 64
  %v2193 = vpop.permute.xlu0 %2192
  %vm2195 = vcmask 261312
  %2196 = vst.msk [vmem:[%s4] sm:$0xff] %vm2195, %v2193
  %2198 = vrot.lane.b32.xlu0 %v2137, 64
  %v2199 = vpop.permute.xlu0 %2198
  %vm2201 = vcmask 326912
  %2202 = vst.msk [vmem:[%s4] sm:$0xff] %vm2201, %v2199
  %2203 = vst.msk [vmem:[%s4] sm:$0xff] %vm213, %v229
  %2204 = vst.msk [vmem:[%s4] sm:$0xff] %vm671, %v686
  %2205 = vst.msk [vmem:[%s4] sm:$0xff] %vm1264, %v1279
  %2206 = vst.msk [vmem:[%s4] sm:$0xff] %vm1690, %v1705
  %2207 = vst.msk [vmem:[%s4] sm:$0xff] %vm2138, %v2153
  %2208 = vst.msk [vmem:[%s5] sm:$0xff] %vm224, 0
  %vm2209 = vcmask 7168
  %2210 = vst.msk [vmem:[%s5] sm:$0xff] %vm2209, %v250
  %vm2211 = vcmask 15368
  %2212 = vst.msk [vmem:[%s5] sm:$0xff] %vm2211, %v705
  %vm2213 = vcmask 23568
  %2214 = vst.msk [vmem:[%s5] sm:$0xff] %vm2213, %v1298
  %vm2215 = vcmask 31768
  %2216 = vst.msk [vmem:[%s5] sm:$0xff] %vm2215, %v1724
  %vm2217 = vcmask 39968
  %2218 = vst.msk [vmem:[%s5] sm:$0xff] %vm2217, %v2172
  // Predicated region
  $region18: #{policy_heads_forward.1} parent=0 // pred_check
    _
  $region19: #{policy_heads_forward.1} parent=0 // pred_check_branch
    %2220 = sbr.rel (0) target = $region21
  $region20: #{policy_heads_forward.1} parent=0 // pred_region
    _
  $region21: #{policy_heads_forward.1} parent=0 // pred_fallthru
    _
  // Predicated region
  $region22: #{policy_heads_forward.1} parent=0 // pred_check
    _
  $region23: #{policy_heads_forward.1} parent=0 // pred_check_branch
    %2222 = sbr.rel (0) target = $region25
  $region24: #{policy_heads_forward.1} parent=0 // pred_region
    _
  $region25: #{policy_heads_forward.1} parent=0 // pred_fallthru
    _
  // Predicated region
  $region26: #{policy_heads_forward.1} parent=0 // pred_check
    _
  $region27: #{policy_heads_forward.1} parent=0 // pred_check_branch
    %2224 = sbr.rel (0) target = $region29
  $region28: #{policy_heads_forward.1} parent=0 // pred_region
    _
  $region29: #{policy_heads_forward.1} parent=0 // pred_fallthru
    _
  // Predicated region
  $region30: #{policy_heads_forward.1} parent=0 // pred_check
    _
  $region31: #{policy_heads_forward.1} parent=0 // pred_check_branch
    %2226 = sbr.rel (0) target = $region33
  $region32: #{policy_heads_forward.1} parent=0 // pred_region
    _
  $region33: #{policy_heads_forward.1} parent=0 // pred_fallthru
    _

</llo_original>
